<compile_context>
chip_gen: v7x
topology: tpu7x:2x2x1
jax: 0.10.0
libtpu: 0.0.40
codegen_flags: <defaults>
</compile_context>

<pallas_src>
import functools
import math

import jax
import jax.numpy as jnp
import numpy as np
from jax.experimental import pallas as pl
from jax.experimental.pallas import tpu as pltpu

_NEG = -1e30  # finite "-inf": keeps exp()/log() free of inf/nan on padded rows/cols


def _clip_loss_kernel(scale_ref, img_ref, txt_ref, out_ref,
                      m_row, l_row, m_col, l_col, acc,
                      *, n_valid, n_pad, tm, tn, text_resident):
    i = pl.program_id(0)                 # row-tile index (image samples)
    j = pl.program_id(1)                 # col-tile index (text samples), fastest
    n_i = pl.num_programs(0)
    n_j = pl.num_programs(1)
    padded = n_valid != n_pad            # static Python bool

    # ------------------------------ init ------------------------------------
    @pl.when((i == 0) & (j == 0))
    def _():
        acc[0] = 0.0

    @pl.when(j == 0)                     # new row tile -> reset row running LSE
    def _():
        m_row[...] = jnp.full((tm, 1), _NEG, jnp.float32)
        l_row[...] = jnp.zeros((tm, 1), jnp.float32)

    @pl.when(i == 0)                     # first row sweep -> reset this col slice
    def _():
        m_col[pl.ds(j, 1), :] = jnp.full((1, tn), _NEG, jnp.float32)
        l_col[pl.ds(j, 1), :] = jnp.zeros((1, tn), jnp.float32)

    # ---------------- logits tile on the MXU (operands in native dtype) ------
    img = img_ref[...]                                           # (tm, d)
    if text_resident:
        col_start = pl.multiple_of(j * tn, tn)
        txt = txt_ref[pl.ds(col_start, tn), :]                   # slice of resident text
    else:
        txt = txt_ref[...]                                       # streamed (tn, d) tile
    raw = jax.lax.dot_general(                                   # (tm, tn) f32
        img, txt,
        dimension_numbers=(((1,), (1,)), ((), ())),              # contract last dims
        preferred_element_type=jnp.float32)

    scale = scale_ref[0, 0]                                      # f32 scalar (SMEM)
    logits = raw * scale                                         # scale applied once, in f32

    if padded:
        # 1-D validity masks only; broadcast inside the selects.
        row_valid = (i * tm + jax.lax.broadcasted_iota(jnp.int32, (tm, 1), 0)) < n_valid
        col_valid = (j * tn + jax.lax.broadcasted_iota(jnp.int32, (1, tn), 1)) < n_valid
        logits = jnp.where(row_valid, logits, _NEG)
        logits = jnp.where(col_valid, logits, _NEG)

    # -------- single shared exp pass (per-row shift) for both directions -----
    row_max = jnp.max(logits, axis=1, keepdims=True)             # (tm, 1)
    col_max = jnp.max(logits, axis=0, keepdims=True)             # (1, tn)
    t_max = jnp.max(row_max, axis=0, keepdims=True)              # (1, 1) tile max
    e = jnp.exp(logits - row_max)                                # ONE (tm, tn) exp
    row_sum = jnp.sum(e, axis=1, keepdims=True)                  # (tm, 1), shift = row_max
    w = jnp.exp(row_max - t_max)                                 # (tm, 1)
    col_sum = jnp.sum(e * w, axis=0, keepdims=True)              # (1, tn), shift = t_max

    # -------- online LSE, row direction (logits_per_image): exact ------------
    m_prev = m_row[...]
    m_new = jnp.maximum(m_prev, row_max)
    l_row[...] = (jnp.exp(m_prev - m_new) * l_row[...]
                  + row_sum * jnp.exp(row_max - m_new))
    m_row[...] = m_new

    # -------- online LSE, col direction (logits_per_text = logits.T) ---------
    # Shared shift t_max; a column whose in-tile max sits > ~88 below t_max can
    # underflow col_sum to 0, so guard with the per-column single-term lower
    # bound exp(col_max - mc_new) (error <= log(tm), only reachable for
    # logit_scale > ~44 with extreme logit spreads).
    mc_prev = m_col[pl.ds(j, 1), :]
    lc_prev = l_col[pl.ds(j, 1), :]
    mc_new = jnp.maximum(mc_prev, col_max)
    safe_sum = jnp.where(col_sum > 0.0, col_sum, 1.0)
    contrib = jnp.where(col_sum > 0.0,
                        jnp.exp(jnp.log(safe_sum) + (t_max - mc_new)),
                        0.0)
    contrib = jnp.maximum(contrib, jnp.exp(col_max - mc_new))
    l_col[pl.ds(j, 1), :] = jnp.exp(mc_prev - mc_new) * lc_prev + contrib
    m_col[pl.ds(j, 1), :] = mc_new

    # -------- diagonal (label) logits: only tiles overlapping the diagonal ---
    @pl.when((i * tm < (j + 1) * tn) & (j * tn < (i + 1) * tm))
    def _():
        rg = i * tm + jax.lax.broadcasted_iota(jnp.int32, (tm, tn), 0)
        cg = j * tn + jax.lax.broadcasted_iota(jnp.int32, (tm, tn), 1)
        # `raw` is exactly 0 on padded rows/cols (zero-padded features), so no
        # extra validity mask is needed here.
        d_sum = jnp.sum(jnp.where(rg == cg, raw, 0.0))
        acc[0] = acc[0] - 2.0 * scale * d_sum

    # -------- finalize row tile (image-direction cross-entropy) --------------
    @pl.when(j == n_j - 1)
    def _():
        row_lse = m_row[...] + jnp.log(l_row[...])               # (tm, 1)
        if padded:
            rid = i * tm + jax.lax.broadcasted_iota(jnp.int32, (tm, 1), 0)
            row_lse = jnp.where(rid < n_valid, row_lse, 0.0)
        acc[0] = acc[0] + jnp.sum(row_lse)

    # -------- finalize col slice (text-direction cross-entropy) --------------
    @pl.when(i == n_i - 1)
    def _():
        col_lse = m_col[pl.ds(j, 1), :] + jnp.log(l_col[pl.ds(j, 1), :])
        if padded:
            cid = j * tn + jax.lax.broadcasted_iota(jnp.int32, (1, tn), 1)
            col_lse = jnp.where(cid < n_valid, col_lse, 0.0)
        acc[0] = acc[0] + jnp.sum(col_lse)

    # -------- write the scalar loss at the very last grid step ---------------
    @pl.when((i == n_i - 1) & (j == n_j - 1))
    def _():
        # TODO(synk): Kahan-compensate / VMEM-vector accumulate `acc` for very
        # large batches (f32 scalar accumulation loses a few ULPs per add).
        out_ref[0, 0] = acc[0] / (2.0 * n_valid)


def _round_up(x, m):
    return ((x + m - 1) // m) * m


def clip_loss(image_features, text_features, logit_scale, *,
              tm=None, tn=None, resident_text=None, mxu_dtype=None,
              resident_budget_bytes=24 * 1024 * 1024):
    """ClipLossOriginal.forward for world_size=1 (single device).

    tm / tn:        image-row / text-col tile sizes (multiples of 128).
    resident_text:  force (True/False) or auto-decide (None) whether the whole
                    text matrix is kept VMEM-resident for the entire kernel.
    mxu_dtype:      optional dtype (e.g. jnp.bfloat16) the feature operands are
                    cast to before the MXU matmul; LSE math is always f32.
    """
    n, d = image_features.shape
    assert text_features.shape == (n, d)

    if mxu_dtype is not None and image_features.dtype != jnp.dtype(mxu_dtype):
        image_features = image_features.astype(mxu_dtype)
        text_features = text_features.astype(mxu_dtype)
    itemsize = jnp.dtype(image_features.dtype).itemsize

    n_al = _round_up(n, 128)

    # Column (text) tile size.
    if tn is None:
        tn = min(256, n_al)
    assert tn % 128 == 0, "tn must be a multiple of 128 (lanes)"
    tn = min(tn, n_al)

    # Residency decision (counts possible double-buffering of the resident block,
    # budget sized for v7x's 64 MiB VMEM).
    if resident_text is None:
        resident_text = 2 * n_al * d * itemsize <= resident_budget_bytes

    # Row (image) tile size: large when streaming text so each streamed text tile
    # is reused against many image rows (MXU-roofline arithmetic intensity).
    if tm is None:
        tm = min(512, n_al) if resident_text else min(1024, n_al)
    assert tm % 128 == 0, "tm must be a multiple of 128 (lanes)"
    tm = min(tm, n_al)
    max_tm = max(128, (16 * 1024 * 1024 // max(1, 2 * d * itemsize)) // 128 * 128)
    tm = min(tm, max_tm)                       # keep img double-buffer modest

    n_pad = _round_up(n, math.lcm(tm, tn))
    if n_pad != n:
        pad = ((0, n_pad - n), (0, 0))
        image_features = jnp.pad(image_features, pad)
        text_features = jnp.pad(text_features, pad)
    n_i = n_pad // tm
    n_j = n_pad // tn

    scale = jnp.asarray(logit_scale, jnp.float32).reshape(1, 1)
    kernel = functools.partial(_clip_loss_kernel,
                               n_valid=n, n_pad=n_pad, tm=tm, tn=tn,
                               text_resident=resident_text)

    if resident_text:
        txt_spec = pl.BlockSpec((n_pad, d), lambda i, j: (0, 0))   # fetched once
        txt_block_rows = n_pad
        txt_hbm_reads = n_pad * d * itemsize
    else:
        txt_spec = pl.BlockSpec((tn, d), lambda i, j: (j, 0))      # streamed per col tile
        txt_block_rows = tn
        txt_hbm_reads = n_i * n_pad * d * itemsize

    cost = pl.CostEstimate(
        flops=2 * n_pad * n_pad * d,
        transcendentals=n_pad * n_pad + 4 * n_pad * max(n_i, n_j),
        bytes_accessed=n_pad * d * itemsize + txt_hbm_reads + 8,
    )

    vmem_est = (2 * tm * d * itemsize                 # image double buffer
                + 2 * txt_block_rows * d * itemsize   # text buffer(s)
                + 8 * tm * tn * 4                     # logits / exp temporaries
                + 8 * (tm + n_j * tn) * 4             # LSE stats
                + (2 << 20))                          # headroom
    vmem_limit = int(min(max(vmem_est, 32 << 20), 56 << 20))   # v7x-safe cap

    out = pl.pallas_call(
        kernel,
        out_shape=jax.ShapeDtypeStruct((1, 1), jnp.float32),
        grid=(n_i, n_j),
        in_specs=[
            pl.BlockSpec(memory_space=pltpu.MemorySpace.SMEM),        # logit_scale
            pl.BlockSpec((tm, d), lambda i, j: (i, 0)),               # image rows
            txt_spec,                                                 # text rows
        ],
        out_specs=pl.BlockSpec(memory_space=pltpu.MemorySpace.SMEM),  # scalar loss
        scratch_shapes=[
            pltpu.VMEM((tm, 1), jnp.float32),     # m_row (running row max)
            pltpu.VMEM((tm, 1), jnp.float32),     # l_row (running row sum-exp)
            pltpu.VMEM((n_j, tn), jnp.float32),   # m_col (running col max)
            pltpu.VMEM((n_j, tn), jnp.float32),   # l_col (running col sum-exp)
            pltpu.SMEM((1,), jnp.float32),        # scalar loss accumulator
        ],
        compiler_params=pltpu.CompilerParams(
            # Both grid axes carry accumulator state -> sequential ("arbitrary").
            # TODO(synk): v7x megacore split of the row-tile sweep across the 2
            # TensorCores (per-core m_col/l_col/acc partials + O(N) LSE merge).
            dimension_semantics=("arbitrary", "arbitrary"),
            vmem_limit_bytes=vmem_limit),
        cost_estimate=cost,
    )(scale, image_features, text_features)
    return out[0, 0]


def _reference_clip_loss(image_features, text_features, logit_scale):
    # Pure-JAX reference mirroring the PyTorch module exactly (world_size=1).
    logits_per_image = logit_scale * image_features @ text_features.T
    logits_per_text = logit_scale * text_features @ image_features.T
    labels = jnp.arange(logits_per_image.shape[0])

    def ce(logits, labels):
        logp = jax.nn.log_softmax(logits, axis=-1)
        return -jnp.mean(logp[jnp.arange(logits.shape[0]), labels])

    return 0.5 * (ce(logits_per_image, labels) + ce(logits_per_text, labels))


if __name__ == "__main__":
    # TODO(synk): world_size > 1 path (gather_features / all_gather) is a
    # distributed collective and is not implemented; single-device semantics only.
    key = jax.random.PRNGKey(0)
    keys = jax.random.split(key, 8)

    def make_inputs(ka, kb, batch, dim):
        img = jax.random.normal(ka, (batch, dim), dtype=jnp.float32)
        txt = jax.random.normal(kb, (batch, dim), dtype=jnp.float32)
        img = img / jnp.linalg.norm(img, axis=-1, keepdims=True)
        txt = txt / jnp.linalg.norm(txt, axis=-1, keepdims=True)
        return img, txt

    # Deterministic logit_scale init: exp(log(1/0.07)) as in CLIP.
    logit_scale = jnp.float32(np.exp(np.log(1.0 / 0.07)))

    # 1) Tiny single-tile case (padding / masking path), f32, resident text.
    img, txt = make_inputs(keys[0], keys[1], 8, 32)
    loss = jax.block_until_ready(jax.jit(clip_loss)(img, txt, logit_scale))
    ref = _reference_clip_loss(img, txt, logit_scale)
    np.testing.assert_allclose(np.asarray(loss), np.asarray(ref),
                               rtol=1e-5, atol=2e-5)

    # 2) Multi-tile ragged case, streamed text (2x2 grid of 128x128 tiles), f32.
    img2, txt2 = make_inputs(keys[2], keys[3], 200, 64)
    f2 = jax.jit(functools.partial(clip_loss, tm=128, tn=128, resident_text=False))
    loss2 = jax.block_until_ready(f2(img2, txt2, logit_scale))
    ref2 = _reference_clip_loss(img2, txt2, logit_scale)
    np.testing.assert_allclose(np.asarray(loss2), np.asarray(ref2),
                               rtol=1e-4, atol=1e-4)

    # 3) bf16 MXU-operand path (resident text); reference uses the same
    #    bf16-rounded features, so only accumulation order differs.
    f3 = jax.jit(functools.partial(clip_loss, tm=128, tn=128,
                                   mxu_dtype=jnp.bfloat16))
    loss3 = jax.block_until_ready(f3(img2, txt2, logit_scale))
    ref3 = _reference_clip_loss(img2.astype(jnp.bfloat16).astype(jnp.float32),
                                txt2.astype(jnp.bfloat16).astype(jnp.float32),
                                logit_scale)
    np.testing.assert_allclose(np.asarray(loss3), np.asarray(ref3),
                               rtol=2e-3, atol=2e-3)

    # 4) Exactly tile-aligned multi-tile case (no padding branch), f32, resident.
    img4, txt4 = make_inputs(keys[4], keys[5], 256, 64)
    f4 = jax.jit(functools.partial(clip_loss, tm=128, tn=128))
    loss4 = jax.block_until_ready(f4(img4, txt4, logit_scale))
    ref4 = _reference_clip_loss(img4, txt4, logit_scale)
    np.testing.assert_allclose(np.asarray(loss4), np.asarray(ref4),
                               rtol=1e-4, atol=1e-4)

    print("KERNEL_OK")
</pallas_src>

<mosaic_0001>
module attributes {stable_mosaic.version = 11 : i64} {
  func.func @_clip_loss_kernel(%arg0: i32, %arg1: i32, %arg2: memref<1x1xf32, #tpu.memory_space<smem>>, %arg3: memref<128x32xf32, #tpu.memory_space<vmem>>, %arg4: memref<128x32xf32, #tpu.memory_space<vmem>>, %arg5: memref<1x1xf32, #tpu.memory_space<smem>>, %arg6: memref<128x1xf32, #tpu.memory_space<vmem>>, %arg7: memref<128x1xf32, #tpu.memory_space<vmem>>, %arg8: memref<1x128xf32, #tpu.memory_space<vmem>>, %arg9: memref<1x128xf32, #tpu.memory_space<vmem>>, %arg10: memref<1xf32, #tpu.memory_space<smem>>) attributes {dimension_semantics = [#tpu.dimension_semantics<arbitrary>, #tpu.dimension_semantics<arbitrary>], iteration_bounds = array<i64: 1, 1>, scalar_prefetch = 0 : i64, scratch_operands = 5 : i64, tpu.core_type = #tpu.core_type<tc>, window_params = [{transform_indices = @transform_0, window_bounds = array<i64: 1, 1>}, {transform_indices = @transform_1, window_bounds = array<i64: 128, 32>}, {pipeline_mode = #tpu.pipeline_mode<synchronous>, transform_indices = @transform_2, window_bounds = array<i64: 128, 32>}, {transform_indices = @transform_3, window_bounds = array<i64: 1, 1>}]} {
    %c0_i32 = arith.constant 0 : i32
    %0 = arith.cmpi eq, %arg0, %c0_i32 : i32
    %c0_i32_0 = arith.constant 0 : i32
    %1 = arith.cmpi eq, %arg1, %c0_i32_0 : i32
    %2 = arith.andi %0, %1 : i1
    %3 = arith.extui %2 : i1 to i32
    %c0_i32_1 = arith.constant 0 : i32
    %4 = arith.cmpi ne, %3, %c0_i32_1 : i32
    scf.if %4 {
      %cst_49 = arith.constant 0.000000e+00 : f32
      %c0_50 = arith.constant 0 : index
      %121 = memref.load %arg10[%c0_50] : memref<1xf32, #tpu.memory_space<smem>>
      memref.store %cst_49, %arg10[%c0_50] : memref<1xf32, #tpu.memory_space<smem>>
    } else {
    }
    %c0_i32_2 = arith.constant 0 : i32
    %5 = arith.cmpi eq, %arg1, %c0_i32_2 : i32
    %6 = arith.extui %5 : i1 to i32
    %c0_i32_3 = arith.constant 0 : i32
    %7 = arith.cmpi ne, %6, %c0_i32_3 : i32
    scf.if %7 {
      %cst_49 = arith.constant -1.000000e+30 : f32
      %121 = vector.broadcast %cst_49 : f32 to vector<128x1xf32>
      %c0_50 = arith.constant 0 : index
      %c0_51 = arith.constant 0 : index
      %122 = vector.load %arg6[%c0_50, %c0_51] : memref<128x1xf32, #tpu.memory_space<vmem>>, vector<128x1xf32>
      tpu.vector_store %arg6[%c0_50, %c0_51], %121 {strides = array<i32>} : memref<128x1xf32, #tpu.memory_space<vmem>>, vector<128x1xf32>,
      %cst_52 = arith.constant 0.000000e+00 : f32
      %123 = vector.broadcast %cst_52 : f32 to vector<128x1xf32>
      %c0_53 = arith.constant 0 : index
      %c0_54 = arith.constant 0 : index
      %124 = vector.load %arg7[%c0_53, %c0_54] : memref<128x1xf32, #tpu.memory_space<vmem>>, vector<128x1xf32>
      tpu.vector_store %arg7[%c0_53, %c0_54], %123 {strides = array<i32>} : memref<128x1xf32, #tpu.memory_space<vmem>>, vector<128x1xf32>,
    } else {
    }
    %c0_i32_4 = arith.constant 0 : i32
    %8 = arith.cmpi eq, %arg0, %c0_i32_4 : i32
    %9 = arith.extui %8 : i1 to i32
    %c0_i32_5 = arith.constant 0 : i32
    %10 = arith.cmpi ne, %9, %c0_i32_5 : i32
    scf.if %10 {
      %cst_49 = arith.constant -1.000000e+30 : f32
      %121 = vector.broadcast %cst_49 : f32 to vector<1x128xf32>
      %122 = arith.index_cast %arg1 : i32 to index
      %c0_50 = arith.constant 0 : index
      %123 = vector.load %arg8[%122, %c0_50] : memref<1x128xf32, #tpu.memory_space<vmem>>, vector<1x128xf32>
      tpu.vector_store %arg8[%122, %c0_50], %121 {strides = array<i32>} : memref<1x128xf32, #tpu.memory_space<vmem>>, vector<1x128xf32>,
      %cst_51 = arith.constant 0.000000e+00 : f32
      %124 = vector.broadcast %cst_51 : f32 to vector<1x128xf32>
      %125 = arith.index_cast %arg1 : i32 to index
      %c0_52 = arith.constant 0 : index
      %126 = vector.load %arg9[%125, %c0_52] : memref<1x128xf32, #tpu.memory_space<vmem>>, vector<1x128xf32>
      tpu.vector_store %arg9[%125, %c0_52], %124 {strides = array<i32>} : memref<1x128xf32, #tpu.memory_space<vmem>>, vector<1x128xf32>,
    } else {
    }
    %c0 = arith.constant 0 : index
    %c0_6 = arith.constant 0 : index
    %11 = vector.load %arg3[%c0, %c0_6] : memref<128x32xf32, #tpu.memory_space<vmem>>, vector<128x32xf32>
    %c128_i32 = arith.constant 128 : i32
    %12 = arith.muli %arg1, %c128_i32 : i32
    %13 = tpu.assume_multiple %12, 128 : i32
    %14 = arith.index_cast %13 : i32 to index
    %c0_7 = arith.constant 0 : index
    %15 = vector.load %arg4[%14, %c0_7] : memref<128x32xf32, #tpu.memory_space<vmem>>, vector<128x32xf32>
    %cst = arith.constant dense<0.000000e+00> : vector<128x128xf32>
    %16 = tpu.matmul %11, %15, %cst {dimension_numbers = #tpu.dot_dimension_numbers<[1], [1], [0], [0], [0, 0, 1, 0], [], []>} : vector<128x32xf32>, vector<128x32xf32>, vector<128x128xf32> -> vector<128x128xf32>
    %c0_8 = arith.constant 0 : index
    %c0_9 = arith.constant 0 : index
    %17 = memref.load %arg2[%c0_8, %c0_9] : memref<1x1xf32, #tpu.memory_space<smem>>
    %18 = vector.broadcast %17 : f32 to vector<128x128xf32>
    %19 = arith.mulf %16, %18 : vector<128x128xf32>
    %c128_i32_10 = arith.constant 128 : i32
    %20 = arith.muli %arg0, %c128_i32_10 : i32
    %21 = tpu.iota {dimensions = array<i32: 0>} : vector<128x1xi32>
    %22 = vector.broadcast %20 : i32 to vector<128x1xi32>
    %23 = arith.addi %22, %21 : vector<128x1xi32>
    %c8_i32 = arith.constant 8 : i32
    %24 = vector.broadcast %c8_i32 : i32 to vector<128x1xi32>
    %25 = arith.cmpi slt, %23, %24 : vector<128x1xi32>
    %c128_i32_11 = arith.constant 128 : i32
    %26 = arith.muli %arg1, %c128_i32_11 : i32
    %27 = tpu.iota {dimensions = array<i32: 1>} : vector<1x128xi32>
    %28 = vector.broadcast %26 : i32 to vector<1x128xi32>
    %29 = arith.addi %28, %27 : vector<1x128xi32>
    %c8_i32_12 = arith.constant 8 : i32
    %30 = vector.broadcast %c8_i32_12 : i32 to vector<1x128xi32>
    %31 = arith.cmpi slt, %29, %30 : vector<1x128xi32>
    %cst_13 = arith.constant -1.000000e+30 : f32
    %32 = vector.shape_cast %25 : vector<128x1xi1> to vector<128x1xi1>
    %33 = vector.broadcast %32 : vector<128x1xi1> to vector<128x128xi1>
    %34 = vector.broadcast %cst_13 : f32 to vector<128x128xf32>
    %35 = arith.select %33, %19, %34 : vector<128x128xi1>, vector<128x128xf32>
    %cst_14 = arith.constant -1.000000e+30 : f32
    %36 = vector.shape_cast %31 : vector<1x128xi1> to vector<1x128xi1>
    %37 = vector.broadcast %36 : vector<1x128xi1> to vector<128x128xi1>
    %38 = vector.broadcast %cst_14 : f32 to vector<128x128xf32>
    %39 = arith.select %37, %35, %38 : vector<128x128xi1>, vector<128x128xf32>
    %cst_15 = arith.constant dense<0xFF800000> : vector<128xf32>
    %40 = vector.multi_reduction <maximumf>, %39, %cst_15 [1] : vector<128x128xf32> to vector<128xf32>
    %41 = vector.shape_cast %40 : vector<128xf32> to vector<128x1xf32>
    %cst_16 = arith.constant dense<0xFF800000> : vector<128xf32>
    %42 = vector.multi_reduction <maximumf>, %39, %cst_16 [0] : vector<128x128xf32> to vector<128xf32>
    %43 = vector.shape_cast %42 : vector<128xf32> to vector<1x128xf32>
    %cst_17 = arith.constant dense<0xFF800000> : vector<1xf32>
    %44 = vector.multi_reduction <maximumf>, %41, %cst_17 [0] : vector<128x1xf32> to vector<1xf32>
    %45 = vector.shape_cast %44 : vector<1xf32> to vector<1x1xf32>
    %46 = vector.broadcast %41 : vector<128x1xf32> to vector<128x128xf32>
    %47 = arith.subf %39, %46 : vector<128x128xf32>
    %48 = math.exp %47 : vector<128x128xf32>
    %cst_18 = arith.constant dense<0.000000e+00> : vector<128xf32>
    %49 = vector.multi_reduction <add>, %48, %cst_18 [1] : vector<128x128xf32> to vector<128xf32>
    %50 = vector.shape_cast %49 : vector<128xf32> to vector<128x1xf32>
    %51 = vector.broadcast %45 : vector<1x1xf32> to vector<128x1xf32>
    %52 = arith.subf %41, %51 : vector<128x1xf32>
    %53 = math.exp %52 : vector<128x1xf32>
    %54 = vector.broadcast %53 : vector<128x1xf32> to vector<128x128xf32>
    %55 = arith.mulf %48, %54 : vector<128x128xf32>
    %cst_19 = arith.constant dense<0.000000e+00> : vector<128xf32>
    %56 = vector.multi_reduction <add>, %55, %cst_19 [0] : vector<128x128xf32> to vector<128xf32>
    %57 = vector.shape_cast %56 : vector<128xf32> to vector<1x128xf32>
    %c0_20 = arith.constant 0 : index
    %c0_21 = arith.constant 0 : index
    %58 = vector.load %arg6[%c0_20, %c0_21] : memref<128x1xf32, #tpu.memory_space<vmem>>, vector<128x1xf32>
    %59 = arith.maximumf %58, %41 : vector<128x1xf32>
    %60 = arith.subf %58, %59 : vector<128x1xf32>
    %61 = math.exp %60 : vector<128x1xf32>
    %c0_22 = arith.constant 0 : index
    %c0_23 = arith.constant 0 : index
    %62 = vector.load %arg7[%c0_22, %c0_23] : memref<128x1xf32, #tpu.memory_space<vmem>>, vector<128x1xf32>
    %63 = arith.mulf %61, %62 : vector<128x1xf32>
    %64 = arith.subf %41, %59 : vector<128x1xf32>
    %65 = math.exp %64 : vector<128x1xf32>
    %66 = arith.mulf %50, %65 : vector<128x1xf32>
    %67 = arith.addf %63, %66 : vector<128x1xf32>
    %c0_24 = arith.constant 0 : index
    %c0_25 = arith.constant 0 : index
    %68 = vector.load %arg7[%c0_24, %c0_25] : memref<128x1xf32, #tpu.memory_space<vmem>>, vector<128x1xf32>
    tpu.vector_store %arg7[%c0_24, %c0_25], %67 {strides = array<i32>} : memref<128x1xf32, #tpu.memory_space<vmem>>, vector<128x1xf32>,
    %c0_26 = arith.constant 0 : index
    %c0_27 = arith.constant 0 : index
    %69 = vector.load %arg6[%c0_26, %c0_27] : memref<128x1xf32, #tpu.memory_space<vmem>>, vector<128x1xf32>
    tpu.vector_store %arg6[%c0_26, %c0_27], %59 {strides = array<i32>} : memref<128x1xf32, #tpu.memory_space<vmem>>, vector<128x1xf32>,
    %70 = arith.index_cast %arg1 : i32 to index
    %c0_28 = arith.constant 0 : index
    %71 = vector.load %arg8[%70, %c0_28] : memref<1x128xf32, #tpu.memory_space<vmem>>, vector<1x128xf32>
    %72 = arith.index_cast %arg1 : i32 to index
    %c0_29 = arith.constant 0 : index
    %73 = vector.load %arg9[%72, %c0_29] : memref<1x128xf32, #tpu.memory_space<vmem>>, vector<1x128xf32>
    %74 = arith.maximumf %71, %43 : vector<1x128xf32>
    %cst_30 = arith.constant 0.000000e+00 : f32
    %75 = vector.broadcast %cst_30 : f32 to vector<1x128xf32>
    %76 = arith.cmpf ogt, %57, %75 : vector<1x128xf32>
    %cst_31 = arith.constant 1.000000e+00 : f32
    %77 = vector.broadcast %cst_31 : f32 to vector<1x128xf32>
    %78 = arith.select %76, %57, %77 : vector<1x128xi1>, vector<1x128xf32>
    %cst_32 = arith.constant 0.000000e+00 : f32
    %79 = vector.broadcast %cst_32 : f32 to vector<1x128xf32>
    %80 = arith.cmpf ogt, %57, %79 : vector<1x128xf32>
    %81 = math.log %78 : vector<1x128xf32>
    %82 = vector.broadcast %45 : vector<1x1xf32> to vector<1x128xf32>
    %83 = arith.subf %82, %74 : vector<1x128xf32>
    %84 = arith.addf %81, %83 : vector<1x128xf32>
    %85 = math.exp %84 : vector<1x128xf32>
    %cst_33 = arith.constant 0.000000e+00 : f32
    %86 = vector.broadcast %cst_33 : f32 to vector<1x128xf32>
    %87 = arith.select %80, %85, %86 : vector<1x128xi1>, vector<1x128xf32>
    %88 = arith.subf %43, %74 : vector<1x128xf32>
    %89 = math.exp %88 : vector<1x128xf32>
    %90 = arith.maximumf %87, %89 : vector<1x128xf32>
    %91 = arith.subf %71, %74 : vector<1x128xf32>
    %92 = math.exp %91 : vector<1x128xf32>
    %93 = arith.mulf %92, %73 : vector<1x128xf32>
    %94 = arith.addf %93, %90 : vector<1x128xf32>
    %95 = arith.index_cast %arg1 : i32 to index
    %c0_34 = arith.constant 0 : index
    %96 = vector.load %arg9[%95, %c0_34] : memref<1x128xf32, #tpu.memory_space<vmem>>, vector<1x128xf32>
    tpu.vector_store %arg9[%95, %c0_34], %94 {strides = array<i32>} : memref<1x128xf32, #tpu.memory_space<vmem>>, vector<1x128xf32>,
    %97 = arith.index_cast %arg1 : i32 to index
    %c0_35 = arith.constant 0 : index
    %98 = vector.load %arg8[%97, %c0_35] : memref<1x128xf32, #tpu.memory_space<vmem>>, vector<1x128xf32>
    tpu.vector_store %arg8[%97, %c0_35], %74 {strides = array<i32>} : memref<1x128xf32, #tpu.memory_space<vmem>>, vector<1x128xf32>,
    %c128_i32_36 = arith.constant 128 : i32
    %99 = arith.muli %arg0, %c128_i32_36 : i32
    %c1_i32 = arith.constant 1 : i32
    %100 = arith.addi %arg1, %c1_i32 : i32
    %c128_i32_37 = arith.constant 128 : i32
    %101 = arith.muli %100, %c128_i32_37 : i32
    %102 = arith.cmpi slt, %99, %101 : i32
    %c128_i32_38 = arith.constant 128 : i32
    %103 = arith.muli %arg1, %c128_i32_38 : i32
    %c1_i32_39 = arith.constant 1 : i32
    %104 = arith.addi %arg0, %c1_i32_39 : i32
    %c128_i32_40 = arith.constant 128 : i32
    %105 = arith.muli %104, %c128_i32_40 : i32
    %106 = arith.cmpi slt, %103, %105 : i32
    %107 = arith.andi %102, %106 : i1
    %108 = arith.extui %107 : i1 to i32
    %c0_i32_41 = arith.constant 0 : i32
    %109 = arith.cmpi ne, %108, %c0_i32_41 : i32
    scf.if %109 {
      %c128_i32_49 = arith.constant 128 : i32
      %121 = arith.muli %arg0, %c128_i32_49 : i32
      %122 = tpu.iota {dimensions = array<i32: 0>} : vector<128x128xi32>
      %123 = vector.broadcast %121 : i32 to vector<128x128xi32>
      %124 = arith.addi %123, %122 : vector<128x128xi32>
      %c128_i32_50 = arith.constant 128 : i32
      %125 = arith.muli %arg1, %c128_i32_50 : i32
      %126 = tpu.iota {dimensions = array<i32: 1>} : vector<128x128xi32>
      %127 = vector.broadcast %125 : i32 to vector<128x128xi32>
      %128 = arith.addi %127, %126 : vector<128x128xi32>
      %129 = arith.cmpi eq, %124, %128 : vector<128x128xi32>
      %cst_51 = arith.constant 0.000000e+00 : f32
      %130 = vector.broadcast %cst_51 : f32 to vector<128x128xf32>
      %131 = arith.select %129, %16, %130 : vector<128x128xi1>, vector<128x128xf32>
      %132 = vector.shape_cast %131 : vector<128x128xf32> to vector<1x128x128xf32>
      %cst_52 = arith.constant dense<0.000000e+00> : vector<1xf32>
      %133 = vector.multi_reduction <add>, %132, %cst_52 [1, 2] : vector<1x128x128xf32> to vector<1xf32>
      %134 = vector.shape_cast %133 : vector<1xf32> to vector<1x1x1xf32>
      %135 = vector.extract %134[0, 0, 0] : f32 from vector<1x1x1xf32>
      %c0_53 = arith.constant 0 : index
      %136 = memref.load %arg10[%c0_53] : memref<1xf32, #tpu.memory_space<smem>>
      %cst_54 = arith.constant 2.000000e+00 : f32
      %137 = arith.mulf %cst_54, %17 : f32
      %138 = arith.mulf %137, %135 : f32
      %139 = arith.subf %136, %138 : f32
      %c0_55 = arith.constant 0 : index
      %140 = memref.load %arg10[%c0_55] : memref<1xf32, #tpu.memory_space<smem>>
      memref.store %139, %arg10[%c0_55] : memref<1xf32, #tpu.memory_space<smem>>
    } else {
    }
    %c0_i32_42 = arith.constant 0 : i32
    %110 = arith.cmpi eq, %arg1, %c0_i32_42 : i32
    %111 = arith.extui %110 : i1 to i32
    %c0_i32_43 = arith.constant 0 : i32
    %112 = arith.cmpi ne, %111, %c0_i32_43 : i32
    scf.if %112 {
      %c0_49 = arith.constant 0 : index
      %c0_50 = arith.constant 0 : index
      %121 = vector.load %arg6[%c0_49, %c0_50] : memref<128x1xf32, #tpu.memory_space<vmem>>, vector<128x1xf32>
      %c0_51 = arith.constant 0 : index
      %c0_52 = arith.constant 0 : index
      %122 = vector.load %arg7[%c0_51, %c0_52] : memref<128x1xf32, #tpu.memory_space<vmem>>, vector<128x1xf32>
      %123 = math.log %122 : vector<128x1xf32>
      %124 = arith.addf %121, %123 : vector<128x1xf32>
      %c128_i32_53 = arith.constant 128 : i32
      %125 = arith.muli %arg0, %c128_i32_53 : i32
      %126 = tpu.iota {dimensions = array<i32: 0>} : vector<128x1xi32>
      %127 = vector.broadcast %125 : i32 to vector<128x1xi32>
      %128 = arith.addi %127, %126 : vector<128x1xi32>
      %c8_i32_54 = arith.constant 8 : i32
      %129 = vector.broadcast %c8_i32_54 : i32 to vector<128x1xi32>
      %130 = arith.cmpi slt, %128, %129 : vector<128x1xi32>
      %cst_55 = arith.constant 0.000000e+00 : f32
      %131 = vector.broadcast %cst_55 : f32 to vector<128x1xf32>
      %132 = arith.select %130, %124, %131 : vector<128x1xi1>, vector<128x1xf32>
      %c0_56 = arith.constant 0 : index
      %133 = memref.load %arg10[%c0_56] : memref<1xf32, #tpu.memory_space<smem>>
      %134 = vector.shape_cast %132 : vector<128x1xf32> to vector<1x128x1xf32>
      %cst_57 = arith.constant dense<0.000000e+00> : vector<1xf32>
      %135 = vector.multi_reduction <add>, %134, %cst_57 [1, 2] : vector<1x128x1xf32> to vector<1xf32>
      %136 = vector.shape_cast %135 : vector<1xf32> to vector<1x1x1xf32>
      %137 = vector.extract %136[0, 0, 0] : f32 from vector<1x1x1xf32>
      %138 = arith.addf %133, %137 : f32
      %c0_58 = arith.constant 0 : index
      %139 = memref.load %arg10[%c0_58] : memref<1xf32, #tpu.memory_space<smem>>
      memref.store %138, %arg10[%c0_58] : memref<1xf32, #tpu.memory_space<smem>>
    } else {
    }
    %c0_i32_44 = arith.constant 0 : i32
    %113 = arith.cmpi eq, %arg0, %c0_i32_44 : i32
    %114 = arith.extui %113 : i1 to i32
    %c0_i32_45 = arith.constant 0 : i32
    %115 = arith.cmpi ne, %114, %c0_i32_45 : i32
    scf.if %115 {
      %121 = arith.index_cast %arg1 : i32 to index
      %c0_49 = arith.constant 0 : index
      %122 = vector.load %arg8[%121, %c0_49] : memref<1x128xf32, #tpu.memory_space<vmem>>, vector<1x128xf32>
      %123 = arith.index_cast %arg1 : i32 to index
      %c0_50 = arith.constant 0 : index
      %124 = vector.load %arg9[%123, %c0_50] : memref<1x128xf32, #tpu.memory_space<vmem>>, vector<1x128xf32>
      %125 = math.log %124 : vector<1x128xf32>
      %126 = arith.addf %122, %125 : vector<1x128xf32>
      %c128_i32_51 = arith.constant 128 : i32
      %127 = arith.muli %arg1, %c128_i32_51 : i32
      %128 = tpu.iota {dimensions = array<i32: 1>} : vector<1x128xi32>
      %129 = vector.broadcast %127 : i32 to vector<1x128xi32>
      %130 = arith.addi %129, %128 : vector<1x128xi32>
      %c8_i32_52 = arith.constant 8 : i32
      %131 = vector.broadcast %c8_i32_52 : i32 to vector<1x128xi32>
      %132 = arith.cmpi slt, %130, %131 : vector<1x128xi32>
      %cst_53 = arith.constant 0.000000e+00 : f32
      %133 = vector.broadcast %cst_53 : f32 to vector<1x128xf32>
      %134 = arith.select %132, %126, %133 : vector<1x128xi1>, vector<1x128xf32>
      %c0_54 = arith.constant 0 : index
      %135 = memref.load %arg10[%c0_54] : memref<1xf32, #tpu.memory_space<smem>>
      %136 = vector.shape_cast %134 : vector<1x128xf32> to vector<1x1x128xf32>
      %cst_55 = arith.constant dense<0.000000e+00> : vector<1xf32>
      %137 = vector.multi_reduction <add>, %136, %cst_55 [1, 2] : vector<1x1x128xf32> to vector<1xf32>
      %138 = vector.shape_cast %137 : vector<1xf32> to vector<1x1x1xf32>
      %139 = vector.extract %138[0, 0, 0] : f32 from vector<1x1x1xf32>
      %140 = arith.addf %135, %139 : f32
      %c0_56 = arith.constant 0 : index
      %141 = memref.load %arg10[%c0_56] : memref<1xf32, #tpu.memory_space<smem>>
      memref.store %140, %arg10[%c0_56] : memref<1xf32, #tpu.memory_space<smem>>
    } else {
    }
    %c0_i32_46 = arith.constant 0 : i32
    %116 = arith.cmpi eq, %arg0, %c0_i32_46 : i32
    %c0_i32_47 = arith.constant 0 : i32
    %117 = arith.cmpi eq, %arg1, %c0_i32_47 : i32
    %118 = arith.andi %116, %117 : i1
    %119 = arith.extui %118 : i1 to i32
    %c0_i32_48 = arith.constant 0 : i32
    %120 = arith.cmpi ne, %119, %c0_i32_48 : i32
    scf.if %120 {
      %c0_49 = arith.constant 0 : index
      %121 = memref.load %arg10[%c0_49] : memref<1xf32, #tpu.memory_space<smem>>
      %cst_50 = arith.constant 1.600000e+01 : f32
      %122 = arith.divf %121, %cst_50 : f32
      %c0_51 = arith.constant 0 : index
      %c0_52 = arith.constant 0 : index
      %123 = memref.load %arg5[%c0_51, %c0_52] : memref<1x1xf32, #tpu.memory_space<smem>>
      memref.store %122, %arg5[%c0_51, %c0_52] : memref<1x1xf32, #tpu.memory_space<smem>>
    } else {
    }
    return
  }
  func.func @transform_0(%arg0: i32, %arg1: i32) -> (i32, i32) {
    %c0_i32 = arith.constant 0 : i32
    %c0_i32_0 = arith.constant 0 : i32
    %c0_i32_1 = arith.constant 0 : i32
    return %c0_i32, %c0_i32_0 : i32, i32
  }
  func.func @transform_1(%arg0: i32, %arg1: i32) -> (i32, i32) {
    %c0_i32 = arith.constant 0 : i32
    %c0_i32_0 = arith.constant 0 : i32
    return %arg0, %c0_i32 : i32, i32
  }
  func.func @transform_2(%arg0: i32, %arg1: i32) -> (i32, i32) {
    %c0_i32 = arith.constant 0 : i32
    %c0_i32_0 = arith.constant 0 : i32
    %c0_i32_1 = arith.constant 0 : i32
    return %c0_i32, %c0_i32_0 : i32, i32
  }
  func.func @transform_3(%arg0: i32, %arg1: i32) -> (i32, i32) {
    %c0_i32 = arith.constant 0 : i32
    %c0_i32_0 = arith.constant 0 : i32
    %c0_i32_1 = arith.constant 0 : i32
    return %c0_i32, %c0_i32_0 : i32, i32
  }
}

</mosaic_0001>

<llo_original>
// kernel: clip_loss.1
$region0: #{clip_loss.1}
  #allocation0 [shape = 'u32[]', space=smem, size = 0x4, offset = 0x4, fixed_abs, tag = 'smem constant byte address 0x4 - core index']
  #allocation1 [shape = 'u32[144,128]{1,0:T(1,128)}', space=vmem, size = 0x12000, scoped, tag = 'internal scratch']
  #allocation2 [shape = 'f32[128,1]{1,0:T(8,128)}', space=vmem, size = 0x10000, scoped, tag = 'scratch operand']
  #allocation3 [shape = 'f32[128,1]{1,0:T(8,128)}', space=vmem, size = 0x10000, scoped, tag = 'scratch operand']
  #allocation4 [shape = 'f32[1,128]{1,0:T(1,128)}', space=vmem, size = 0x200, scoped, tag = 'scratch operand']
  #allocation5 [shape = 'f32[1,128]{1,0:T(1,128)}', space=vmem, size = 0x200, scoped, tag = 'scratch operand']
  #allocation6 [shape = 'f32[1]{0:T(128)}', space=smem, size = 0x200, scoped, tag = 'scratch operand']
  #allocation7 [shape = 'f32[1,1]{1,0:T(1,128)S(6)}', space=smem, size = 0x200, scoped, tag = 'scoped memory for clip_loss.1']
  %s0 = inlined_call_operand.<no memory space> [shape: f32[1,1], index: 0, kind: input, shape index: {}]
  %s1 = inlined_call_operand.vmem [shape: f32[128,32], index: 1, kind: input, shape index: {}]
  %s2 = inlined_call_operand.vmem [shape: f32[128,32], index: 2, kind: input, shape index: {}]
  %s3 = inlined_call_operand.hbm [shape: f32[1,1], index: 3, kind: output, shape index: {}]
  %s4 = sld [smem:[#allocation0]]
  $region50: #{clip_loss.1} parent=0
    _
  %s6 = ssub.s32 1, %s4
  %s7 = scalar_select 0, %s6, %s4
  %8 = sst [smem:[#allocation7]] %s0
  $region1: #{clip_loss.1} parent=0
    #allocation8 [shape = 'u8[512]{0}', space=smem, size = 0x200, scoped, tag = 'output window, operand 0, single buffered']
    #allocation9 [shape = 's32[1]{0}', space=sflag, size = 0x4, scoped, tag = 'scoped memory for clip_loss.1']
    %9 = vsyncpa [#allocation9], 0
    // Predicated region
    $region2: #{clip_loss.1} parent=1 // pred_check
      _
    $region3: #{clip_loss.1} parent=1 // pred_check_branch
      %11 = sbr.rel (0) target = $region5
    $region4: #{clip_loss.1} parent=1 // pred_region
      _
    $region5: #{clip_loss.1} parent=1 // pred_fallthru
      _
    // Predicated region
    $region6: #{clip_loss.1} parent=1 // pred_check
      _
    $region7: #{clip_loss.1} parent=1 // pred_check_branch
      %13 = sbr.rel (0) target = $region9
    $region8: #{clip_loss.1} parent=1 // pred_region
      _
    $region9: #{clip_loss.1} parent=1 // pred_fallthru
      _
    // Predicated region
    $region10: #{clip_loss.1} parent=1 // pred_check
      _
    $region11: #{clip_loss.1} parent=1 // pred_check_branch
      %15 = sbr.rel (0) target = $region13
    $region12: #{clip_loss.1} parent=1 // pred_region
      _
    $region13: #{clip_loss.1} parent=1 // pred_fallthru
      _
    %p16 = scmp.eq.s32.totalorder 0, 0
    %p17 = scmp.eq.s32.totalorder 0, 0
    %p18 = pnand %p16, %p17
    %p19 = pneg %p18
    // Predicated region
    $region14: #{clip_loss.1} parent=1 // pred_check
      _
    $region15: #{clip_loss.1} parent=1 // pred_check_branch
      %21 = sbr.rel (%p18) target = $region17
    $region16: #{clip_loss.1} parent=1 // pred_region
      %s22 = scalar_lea.smem [#allocation6], 0
      %23 = sst [smem:[%s22]] 0.0
    $region17: #{clip_loss.1} parent=1 // pred_fallthru
      _
    // Predicated region
    $region18: #{clip_loss.1} parent=1 // pred_check
      %p24 = pneg %p17
    $region19: #{clip_loss.1} parent=1 // pred_check_branch
      %26 = sbr.rel (%p24) target = $region21
    $region20: #{clip_loss.1} parent=1 // pred_region
      %vm27 = vcmask 7168
      %28 = vst.msk [vmem:[#allocation2] sm:$0xff] %vm27, -1e+30
      %29 = vst.msk [vmem:[#allocation2 + $0x8] sm:$0xff] %vm27, -1e+30
      %30 = vst.msk [vmem:[#allocation2 + $0x10] sm:$0xff] %vm27, -1e+30
      %31 = vst.msk [vmem:[#allocation2 + $0x18] sm:$0xff] %vm27, -1e+30
      %32 = vst.msk [vmem:[#allocation2 + $0x20] sm:$0xff] %vm27, -1e+30
      %33 = vst.msk [vmem:[#allocation2 + $0x28] sm:$0xff] %vm27, -1e+30
      %34 = vst.msk [vmem:[#allocation2 + $0x30] sm:$0xff] %vm27, -1e+30
      %35 = vst.msk [vmem:[#allocation2 + $0x38] sm:$0xff] %vm27, -1e+30
      %36 = vst.msk [vmem:[#allocation2 + $0x40] sm:$0xff] %vm27, -1e+30
      %37 = vst.msk [vmem:[#allocation2 + $0x48] sm:$0xff] %vm27, -1e+30
      %38 = vst.msk [vmem:[#allocation2 + $0x50] sm:$0xff] %vm27, -1e+30
      %39 = vst.msk [vmem:[#allocation2 + $0x58] sm:$0xff] %vm27, -1e+30
      %40 = vst.msk [vmem:[#allocation2 + $0x60] sm:$0xff] %vm27, -1e+30
      %41 = vst.msk [vmem:[#allocation2 + $0x68] sm:$0xff] %vm27, -1e+30
      %42 = vst.msk [vmem:[#allocation2 + $0x70] sm:$0xff] %vm27, -1e+30
      %43 = vst.msk [vmem:[#allocation2 + $0x78] sm:$0xff] %vm27, -1e+30
      %44 = vst.msk [vmem:[#allocation3] sm:$0xff] %vm27, 0.0
      %45 = vst.msk [vmem:[#allocation3 + $0x8] sm:$0xff] %vm27, 0.0
      %46 = vst.msk [vmem:[#allocation3 + $0x10] sm:$0xff] %vm27, 0.0
      %47 = vst.msk [vmem:[#allocation3 + $0x18] sm:$0xff] %vm27, 0.0
      %48 = vst.msk [vmem:[#allocation3 + $0x20] sm:$0xff] %vm27, 0.0
      %49 = vst.msk [vmem:[#allocation3 + $0x28] sm:$0xff] %vm27, 0.0
      %50 = vst.msk [vmem:[#allocation3 + $0x30] sm:$0xff] %vm27, 0.0
      %51 = vst.msk [vmem:[#allocation3 + $0x38] sm:$0xff] %vm27, 0.0
      %52 = vst.msk [vmem:[#allocation3 + $0x40] sm:$0xff] %vm27, 0.0
      %53 = vst.msk [vmem:[#allocation3 + $0x48] sm:$0xff] %vm27, 0.0
      %54 = vst.msk [vmem:[#allocation3 + $0x50] sm:$0xff] %vm27, 0.0
      %55 = vst.msk [vmem:[#allocation3 + $0x58] sm:$0xff] %vm27, 0.0
      %56 = vst.msk [vmem:[#allocation3 + $0x60] sm:$0xff] %vm27, 0.0
      %57 = vst.msk [vmem:[#allocation3 + $0x68] sm:$0xff] %vm27, 0.0
      %58 = vst.msk [vmem:[#allocation3 + $0x70] sm:$0xff] %vm27, 0.0
      %59 = vst.msk [vmem:[#allocation3 + $0x78] sm:$0xff] %vm27, 0.0
    $region21: #{clip_loss.1} parent=1 // pred_fallthru
      _
    // Predicated region
    $region22: #{clip_loss.1} parent=1 // pred_check
      %p60 = pneg %p16
    $region23: #{clip_loss.1} parent=1 // pred_check_branch
      %62 = sbr.rel (%p60) target = $region25
    $region24: #{clip_loss.1} parent=1 // pred_region
      %63 = vst [vmem:[#allocation4] sm:$0x1] -1e+30
      %64 = vst [vmem:[#allocation5] sm:$0x1] 0.0
    $region25: #{clip_loss.1} parent=1 // pred_fallthru
      _
    %v65 = vld [vmem:[%s1] sm:$0xff]
    %v66 = vld [vmem:[%s1 + $0x8] sm:$0xff]
    %v67 = vld [vmem:[%s1 + $0x10] sm:$0xff]
    %v68 = vld [vmem:[%s1 + $0x18] sm:$0xff]
    %v69 = vld [vmem:[%s1 + $0x20] sm:$0xff]
    %v70 = vld [vmem:[%s1 + $0x28] sm:$0xff]
    %v71 = vld [vmem:[%s1 + $0x30] sm:$0xff]
    %v72 = vld [vmem:[%s1 + $0x38] sm:$0xff]
    %v73 = vld [vmem:[%s1 + $0x40] sm:$0xff]
    %v74 = vld [vmem:[%s1 + $0x48] sm:$0xff]
    %v75 = vld [vmem:[%s1 + $0x50] sm:$0xff]
    %v76 = vld [vmem:[%s1 + $0x58] sm:$0xff]
    %v77 = vld [vmem:[%s1 + $0x60] sm:$0xff]
    %v78 = vld [vmem:[%s1 + $0x68] sm:$0xff]
    %v79 = vld [vmem:[%s1 + $0x70] sm:$0xff]
    %v80 = vld [vmem:[%s1 + $0x78] sm:$0xff]
    %s81 = smul.u32 0, 128
    %s82 = scalar_lea.vmem %s2, %s81
    %v83 = vld [vmem:[%s82] sm:$0xff]
    %v84 = vld [vmem:[%s82 + $0x8] sm:$0xff]
    %v85 = vld [vmem:[%s82 + $0x10] sm:$0xff]
    %v86 = vld [vmem:[%s82 + $0x18] sm:$0xff]
    %v87 = vld [vmem:[%s82 + $0x20] sm:$0xff]
    %v88 = vld [vmem:[%s82 + $0x28] sm:$0xff]
    %v89 = vld [vmem:[%s82 + $0x30] sm:$0xff]
    %v90 = vld [vmem:[%s82 + $0x38] sm:$0xff]
    %v91 = vld [vmem:[%s82 + $0x40] sm:$0xff]
    %v92 = vld [vmem:[%s82 + $0x48] sm:$0xff]
    %v93 = vld [vmem:[%s82 + $0x50] sm:$0xff]
    %v94 = vld [vmem:[%s82 + $0x58] sm:$0xff]
    %v95 = vld [vmem:[%s82 + $0x60] sm:$0xff]
    %v96 = vld [vmem:[%s82 + $0x68] sm:$0xff]
    %v97 = vld [vmem:[%s82 + $0x70] sm:$0xff]
    %v98 = vld [vmem:[%s82 + $0x78] sm:$0xff]
    %vm99 = vcmask 261120
    %v101 = vsel %vm99, %v65, 0
    %v104 = vsel %vm99, %v66, 0
    %v107 = vsel %vm99, %v67, 0
    %v110 = vsel %vm99, %v68, 0
    %v113 = vsel %vm99, %v69, 0
    %v116 = vsel %vm99, %v70, 0
    %v119 = vsel %vm99, %v71, 0
    %v122 = vsel %vm99, %v72, 0
    %v125 = vsel %vm99, %v73, 0
    %v128 = vsel %vm99, %v74, 0
    %v131 = vsel %vm99, %v75, 0
    %v134 = vsel %vm99, %v76, 0
    %v137 = vsel %vm99, %v77, 0
    %v140 = vsel %vm99, %v78, 0
    %v143 = vsel %vm99, %v79, 0
    %v146 = vsel %vm99, %v80, 0
    %v149 = vsel %vm99, %v83, 0
    %v152 = vsel %vm99, %v84, 0
    %v155 = vsel %vm99, %v85, 0
    %v158 = vsel %vm99, %v86, 0
    %v161 = vsel %vm99, %v87, 0
    %v164 = vsel %vm99, %v88, 0
    %v167 = vsel %vm99, %v89, 0
    %v170 = vsel %vm99, %v90, 0
    %v173 = vsel %vm99, %v91, 0
    %v176 = vsel %vm99, %v92, 0
    %v179 = vsel %vm99, %v93, 0
    %v182 = vsel %vm99, %v94, 0
    %v185 = vsel %vm99, %v95, 0
    %v188 = vsel %vm99, %v96, 0
    %v191 = vsel %vm99, %v97, 0
    %v194 = vsel %vm99, %v98, 0
    %196 = vmatprep.subr.mxu0 0.0
    %197 = vmatpush1.xpose.msra.mxu0 %v149
    %198 = vmatprep.subr.mxu0 0.0
    %199 = vmatpush1.xpose.msra.mxu0 %v152
    %200 = vmatprep.subr.mxu0 0.0
    %201 = vmatpush1.xpose.msra.mxu0 %v155
    %202 = vmatprep.subr.mxu0 0.0
    %203 = vmatpush1.xpose.msra.mxu0 %v158
    %204 = vmatprep.subr.mxu0 0.0
    %205 = vmatpush1.xpose.msra.mxu0 %v161
    %206 = vmatprep.subr.mxu0 0.0
    %207 = vmatpush1.xpose.msra.mxu0 %v164
    %208 = vmatprep.subr.mxu0 0.0
    %209 = vmatpush1.xpose.msra.mxu0 %v167
    %210 = vmatprep.subr.mxu0 0.0
    %211 = vmatpush1.xpose.msra.mxu0 %v170
    %212 = vmatprep.subr.mxu0 0.0
    %213 = vmatpush1.xpose.msra.mxu0 %v173
    %214 = vmatprep.subr.mxu0 0.0
    %215 = vmatpush1.xpose.msra.mxu0 %v176
    %216 = vmatprep.subr.mxu0 0.0
    %217 = vmatpush1.xpose.msra.mxu0 %v179
    %218 = vmatprep.subr.mxu0 0.0
    %219 = vmatpush1.xpose.msra.mxu0 %v182
    %220 = vmatprep.subr.mxu0 0.0
    %221 = vmatpush1.xpose.msra.mxu0 %v185
    %222 = vmatprep.subr.mxu0 0.0
    %223 = vmatpush1.xpose.msra.mxu0 %v188
    %224 = vmatprep.subr.mxu0 0.0
    %225 = vmatpush1.xpose.msra.mxu0 %v191
    %226 = vmatprep.subr.mxu0 0.0
    %227 = vmatpush1.xpose.msra.mxu0 %v194
    %228 = vmatprep.subr.mxu0 0.0
    %229 = vmatpush1.xpose.msra.mxu0 0.0
    %230 = vmatprep.subr.mxu0 0.0
    %231 = vmatpush1.xpose.msra.mxu0 0.0
    %232 = vmatprep.subr.mxu0 0.0
    %233 = vmatpush1.xpose.msra.mxu0 0.0
    %234 = vmatprep.subr.mxu0 0.0
    %235 = vmatpush1.xpose.msra.mxu0 0.0
    %236 = vmatprep.subr.mxu0 0.0
    %237 = vmatpush1.xpose.msra.mxu0 0.0
    %238 = vmatprep.subr.mxu0 0.0
    %239 = vmatpush1.xpose.msra.mxu0 0.0
    %240 = vmatprep.subr.mxu0 0.0
    %241 = vmatpush1.xpose.msra.mxu0 0.0
    %242 = vmatprep.subr.mxu0 0.0
    %243 = vmatpush1.xpose.msra.mxu0 0.0
    %244 = vmatprep.subr.mxu0 0.0
    %245 = vmatpush1.xpose.msra.mxu0 0.0
    %246 = vmatprep.subr.mxu0 0.0
    %247 = vmatpush1.xpose.msra.mxu0 0.0
    %248 = vmatprep.subr.mxu0 0.0
    %249 = vmatpush1.xpose.msra.mxu0 0.0
    %250 = vmatprep.subr.mxu0 0.0
    %251 = vmatpush1.xpose.msra.mxu0 0.0
    %252 = vmatprep.subr.mxu0 0.0
    %253 = vmatpush1.xpose.msra.mxu0 0.0
    %254 = vmatprep.subr.mxu0 0.0
    %255 = vmatpush1.xpose.msra.mxu0 0.0
    %256 = vmatprep.subr.mxu0 0.0
    %257 = vmatpush1.xpose.msra.mxu0 0.0
    %258 = vmatprep.subr.mxu0 0.0
    %259 = vmatpush1.xpose.msra.mxu0 0.0
    %260 = vmatprep.mubr.f32.mxu0 0.0
    %261 = vmatmul.mubr.f32.gmra.mrb[0].mxu0 %v101
    %v262 = vpop.f32.mrb[0].mxu0
    %v263 = vadd.f32 0.0, %v262
    %v264 = vpop.f32.mrb[0].mxu0
    %265 = vmatprep.mubr.f32.mxu0 0.0
    %266 = vmatmul.mubr.f32.gmra.mrb[0].mxu0 %v104
    %v267 = vpop.f32.mrb[0].mxu0
    %v268 = vadd.f32 0.0, %v267
    %v269 = vpop.f32.mrb[0].mxu0
    %270 = vmatprep.mubr.f32.mxu0 0.0
    %271 = vmatmul.mubr.f32.gmra.mrb[0].mxu0 %v107
    %v272 = vpop.f32.mrb[0].mxu0
    %v273 = vadd.f32 0.0, %v272
    %v274 = vpop.f32.mrb[0].mxu0
    %275 = vmatprep.mubr.f32.mxu0 0.0
    %276 = vmatmul.mubr.f32.gmra.mrb[0].mxu0 %v110
    %v277 = vpop.f32.mrb[0].mxu0
    %v278 = vadd.f32 0.0, %v277
    %v279 = vpop.f32.mrb[0].mxu0
    %280 = vmatprep.mubr.f32.mxu0 0.0
    %281 = vmatmul.mubr.f32.gmra.mrb[0].mxu0 %v113
    %v282 = vpop.f32.mrb[0].mxu0
    %v283 = vadd.f32 0.0, %v282
    %v284 = vpop.f32.mrb[0].mxu0
    %285 = vmatprep.mubr.f32.mxu0 0.0
    %286 = vmatmul.mubr.f32.gmra.mrb[0].mxu0 %v116
    %v287 = vpop.f32.mrb[0].mxu0
    %v288 = vadd.f32 0.0, %v287
    %v289 = vpop.f32.mrb[0].mxu0
    %290 = vmatprep.mubr.f32.mxu0 0.0
    %291 = vmatmul.mubr.f32.gmra.mrb[0].mxu0 %v119
    %v292 = vpop.f32.mrb[0].mxu0
    %v293 = vadd.f32 0.0, %v292
    %v294 = vpop.f32.mrb[0].mxu0
    %295 = vmatprep.mubr.f32.mxu0 0.0
    %296 = vmatmul.mubr.f32.gmra.mrb[0].mxu0 %v122
    %v297 = vpop.f32.mrb[0].mxu0
    %v298 = vadd.f32 0.0, %v297
    %v299 = vpop.f32.mrb[0].mxu0
    %300 = vmatprep.mubr.f32.mxu0 0.0
    %301 = vmatmul.mubr.f32.gmra.mrb[0].mxu0 %v125
    %v302 = vpop.f32.mrb[0].mxu0
    %v303 = vadd.f32 0.0, %v302
    %v304 = vpop.f32.mrb[0].mxu0
    %305 = vmatprep.mubr.f32.mxu0 0.0
    %306 = vmatmul.mubr.f32.gmra.mrb[0].mxu0 %v128
    %v307 = vpop.f32.mrb[0].mxu0
    %v308 = vadd.f32 0.0, %v307
    %v309 = vpop.f32.mrb[0].mxu0
    %310 = vmatprep.mubr.f32.mxu0 0.0
    %311 = vmatmul.mubr.f32.gmra.mrb[0].mxu0 %v131
    %v312 = vpop.f32.mrb[0].mxu0
    %v313 = vadd.f32 0.0, %v312
    %v314 = vpop.f32.mrb[0].mxu0
    %315 = vmatprep.mubr.f32.mxu0 0.0
    %316 = vmatmul.mubr.f32.gmra.mrb[0].mxu0 %v134
    %v317 = vpop.f32.mrb[0].mxu0
    %v318 = vadd.f32 0.0, %v317
    %v319 = vpop.f32.mrb[0].mxu0
    %320 = vmatprep.mubr.f32.mxu0 0.0
    %321 = vmatmul.mubr.f32.gmra.mrb[0].mxu0 %v137
    %v322 = vpop.f32.mrb[0].mxu0
    %v323 = vadd.f32 0.0, %v322
    %v324 = vpop.f32.mrb[0].mxu0
    %325 = vmatprep.mubr.f32.mxu0 0.0
    %326 = vmatmul.mubr.f32.gmra.mrb[0].mxu0 %v140
    %v327 = vpop.f32.mrb[0].mxu0
    %v328 = vadd.f32 0.0, %v327
    %v329 = vpop.f32.mrb[0].mxu0
    %330 = vmatprep.mubr.f32.mxu0 0.0
    %331 = vmatmul.mubr.f32.gmra.mrb[0].mxu0 %v143
    %v332 = vpop.f32.mrb[0].mxu0
    %v333 = vadd.f32 0.0, %v332
    %v334 = vpop.f32.mrb[0].mxu0
    %335 = vmatprep.mubr.f32.mxu0 0.0
    %336 = vmatmul.mubr.f32.gmra.mrb[0].mxu0 %v146
    %v337 = vpop.f32.mrb[0].mxu0
    %v338 = vadd.f32 0.0, %v337
    %v339 = vpop.f32.mrb[0].mxu0
    %340 = vdwg.mxu0
    %s341 = sld [smem:[#allocation7]]
    %v342 = vstv %s341
    %v343 = vmul.f32 %v263, %v342
    %v344 = vmul.f32 %v268, %v342
    %v345 = vmul.f32 %v273, %v342
    %v346 = vmul.f32 %v278, %v342
    %v347 = vmul.f32 %v283, %v342
    %v348 = vmul.f32 %v288, %v342
    %v349 = vmul.f32 %v293, %v342
    %v350 = vmul.f32 %v298, %v342
    %v351 = vmul.f32 %v303, %v342
    %v352 = vmul.f32 %v308, %v342
    %v353 = vmul.f32 %v313, %v342
    %v354 = vmul.f32 %v318, %v342
    %v355 = vmul.f32 %v323, %v342
    %v356 = vmul.f32 %v328, %v342
    %v357 = vmul.f32 %v333, %v342
    %v358 = vmul.f32 %v338, %v342
    %s359 = smul.u32 0, 128
    %v360 = vlaneseq
    %v361 = vshrl.u32 %v360, 7
    %v362 = vadd.s32 %v361, 8
    %v363 = vadd.s32 %v361, 16
    %v364 = vadd.s32 %v361, 24
    %v365 = vadd.s32 %v361, 32
    %v366 = vadd.s32 %v361, 40
    %v367 = vadd.s32 %v361, 48
    %v368 = vadd.s32 %v361, 56
    %v369 = vadd.s32 %v361, 64
    %v370 = vadd.s32 %v361, 72
    %v371 = vadd.s32 %v361, 80
    %v372 = vadd.s32 %v361, 88
    %v373 = vadd.s32 %v361, 96
    %v374 = vadd.s32 %v361, 104
    %v375 = vadd.s32 %v361, 112
    %v376 = vadd.s32 %v361, 120
    %v377 = vstv %s359
    %v378 = vadd.s32 %v377, %v361
    %v379 = vadd.s32 %v377, %v362
    %v380 = vadd.s32 %v377, %v363
    %v381 = vadd.s32 %v377, %v364
    %v382 = vadd.s32 %v377, %v365
    %v383 = vadd.s32 %v377, %v366
    %v384 = vadd.s32 %v377, %v367
    %v385 = vadd.s32 %v377, %v368
    %v386 = vadd.s32 %v377, %v369
    %v387 = vadd.s32 %v377, %v370
    %v388 = vadd.s32 %v377, %v371
    %v389 = vadd.s32 %v377, %v372
    %v390 = vadd.s32 %v377, %v373
    %v391 = vadd.s32 %v377, %v374
    %v392 = vadd.s32 %v377, %v375
    %v393 = vadd.s32 %v377, %v376
    %vm394 = vcmp.lt.s32.totalorder %v378, 8
    %vm395 = vcmp.lt.s32.totalorder %v379, 8
    %vm396 = vcmp.lt.s32.totalorder %v380, 8
    %vm397 = vcmp.lt.s32.totalorder %v381, 8
    %vm398 = vcmp.lt.s32.totalorder %v382, 8
    %vm399 = vcmp.lt.s32.totalorder %v383, 8
    %vm400 = vcmp.lt.s32.totalorder %v384, 8
    %vm401 = vcmp.lt.s32.totalorder %v385, 8
    %vm402 = vcmp.lt.s32.totalorder %v386, 8
    %vm403 = vcmp.lt.s32.totalorder %v387, 8
    %vm404 = vcmp.lt.s32.totalorder %v388, 8
    %vm405 = vcmp.lt.s32.totalorder %v389, 8
    %vm406 = vcmp.lt.s32.totalorder %v390, 8
    %vm407 = vcmp.lt.s32.totalorder %v391, 8
    %vm408 = vcmp.lt.s32.totalorder %v392, 8
    %vm409 = vcmp.lt.s32.totalorder %v393, 8
    %v410 = vlaneseq
    %v411 = vand.u32 %v410, 127
    %v412 = vstv %s81
    %v413 = vadd.s32 %v412, %v411
    %vm414 = vcmp.lt.s32.totalorder %v413, 8
    %v415 = vsel %vm394, 1, 0
    %v416 = vsel %vm395, 1, 0
    %v417 = vsel %vm396, 1, 0
    %v418 = vsel %vm397, 1, 0
    %v419 = vsel %vm398, 1, 0
    %v420 = vsel %vm399, 1, 0
    %v421 = vsel %vm400, 1, 0
    %v422 = vsel %vm401, 1, 0
    %v423 = vsel %vm402, 1, 0
    %v424 = vsel %vm403, 1, 0
    %v425 = vsel %vm404, 1, 0
    %v426 = vsel %vm405, 1, 0
    %v427 = vsel %vm406, 1, 0
    %v428 = vsel %vm407, 1, 0
    %v429 = vsel %vm408, 1, 0
    %v430 = vsel %vm409, 1, 0
    %vm431 = vcmp.eq.s32.totalorder %v415, 1
    %vm432 = vcmp.eq.s32.totalorder %v416, 1
    %vm433 = vcmp.eq.s32.totalorder %v417, 1
    %vm434 = vcmp.eq.s32.totalorder %v418, 1
    %vm435 = vcmp.eq.s32.totalorder %v419, 1
    %vm436 = vcmp.eq.s32.totalorder %v420, 1
    %vm437 = vcmp.eq.s32.totalorder %v421, 1
    %vm438 = vcmp.eq.s32.totalorder %v422, 1
    %vm439 = vcmp.eq.s32.totalorder %v423, 1
    %vm440 = vcmp.eq.s32.totalorder %v424, 1
    %vm441 = vcmp.eq.s32.totalorder %v425, 1
    %vm442 = vcmp.eq.s32.totalorder %v426, 1
    %vm443 = vcmp.eq.s32.totalorder %v427, 1
    %vm444 = vcmp.eq.s32.totalorder %v428, 1
    %vm445 = vcmp.eq.s32.totalorder %v429, 1
    %vm446 = vcmp.eq.s32.totalorder %v430, 1
    %v447 = vsel %vm431, %v343, -1e+30
    %v448 = vsel %vm432, %v344, -1e+30
    %v449 = vsel %vm433, %v345, -1e+30
    %v450 = vsel %vm434, %v346, -1e+30
    %v451 = vsel %vm435, %v347, -1e+30
    %v452 = vsel %vm436, %v348, -1e+30
    %v453 = vsel %vm437, %v349, -1e+30
    %v454 = vsel %vm438, %v350, -1e+30
    %v455 = vsel %vm439, %v351, -1e+30
    %v456 = vsel %vm440, %v352, -1e+30
    %v457 = vsel %vm441, %v353, -1e+30
    %v458 = vsel %vm442, %v354, -1e+30
    %v459 = vsel %vm443, %v355, -1e+30
    %v460 = vsel %vm444, %v356, -1e+30
    %v461 = vsel %vm445, %v357, -1e+30
    %v462 = vsel %vm446, %v358, -1e+30
    %v463 = vsel %vm414, 1, 0
    %vm464 = vcmp.eq.s32.totalorder %v463, 1
    %v465 = vsel %vm464, %v447, -1e+30
    %v466 = vsel %vm464, %v448, -1e+30
    %v467 = vsel %vm464, %v449, -1e+30
    %v468 = vsel %vm464, %v450, -1e+30
    %v469 = vsel %vm464, %v451, -1e+30
    %v470 = vsel %vm464, %v452, -1e+30
    %v471 = vsel %vm464, %v453, -1e+30
    %v472 = vsel %vm464, %v454, -1e+30
    %v473 = vsel %vm464, %v455, -1e+30
    %v474 = vsel %vm464, %v456, -1e+30
    %v475 = vsel %vm464, %v457, -1e+30
    %v476 = vsel %vm464, %v458, -1e+30
    %v477 = vsel %vm464, %v459, -1e+30
    %v478 = vsel %vm464, %v460, -1e+30
    %v479 = vsel %vm464, %v461, -1e+30
    %v480 = vsel %vm464, %v462, -1e+30
    %481 = vmax.xlane.f32.xlu0 %v465
    %v482 = vpop.xlane.xlu0 %481
    %483 = vmax.xlane.f32.xlu0 %v466
    %v484 = vpop.xlane.xlu0 %483
    %485 = vmax.xlane.f32.xlu0 %v467
    %v486 = vpop.xlane.xlu0 %485
    %487 = vmax.xlane.f32.xlu0 %v468
    %v488 = vpop.xlane.xlu0 %487
    %489 = vmax.xlane.f32.xlu0 %v469
    %v490 = vpop.xlane.xlu0 %489
    %491 = vmax.xlane.f32.xlu0 %v470
    %v492 = vpop.xlane.xlu0 %491
    %493 = vmax.xlane.f32.xlu0 %v471
    %v494 = vpop.xlane.xlu0 %493
    %495 = vmax.xlane.f32.xlu0 %v472
    %v496 = vpop.xlane.xlu0 %495
    %497 = vmax.xlane.f32.xlu0 %v473
    %v498 = vpop.xlane.xlu0 %497
    %499 = vmax.xlane.f32.xlu0 %v474
    %v500 = vpop.xlane.xlu0 %499
    %501 = vmax.xlane.f32.xlu0 %v475
    %v502 = vpop.xlane.xlu0 %501
    %503 = vmax.xlane.f32.xlu0 %v476
    %v504 = vpop.xlane.xlu0 %503
    %505 = vmax.xlane.f32.xlu0 %v477
    %v506 = vpop.xlane.xlu0 %505
    %507 = vmax.xlane.f32.xlu0 %v478
    %v508 = vpop.xlane.xlu0 %507
    %509 = vmax.xlane.f32.xlu0 %v479
    %v510 = vpop.xlane.xlu0 %509
    %511 = vmax.xlane.f32.xlu0 %v480
    %v512 = vpop.xlane.xlu0 %511
    %v513 = vmax.f32 %v465, %v469
    %v514 = vmax.f32 %v466, %v470
    %v515 = vmax.f32 %v467, %v471
    %v516 = vmax.f32 %v468, %v472
    %v517 = vmax.f32 %v513, %v473
    %v518 = vmax.f32 %v514, %v474
    %v519 = vmax.f32 %v515, %v475
    %v520 = vmax.f32 %v516, %v476
    %v521 = vmax.f32 %v517, %v477
    %v522 = vmax.f32 %v518, %v478
    %v523 = vmax.f32 %v519, %v479
    %v524 = vmax.f32 %v520, %v480
    %v525 = vmax.f32 %v521, %v522
    %v526 = vmax.f32 %v523, %v524
    %v527 = vmax.f32 %v525, %v526
    %v528 = vrot.slane %v527, 4
    %v529 = vmax.f32 %v527, %v528
    %v530 = vrot.slane %v529, 2
    %v531 = vmax.f32 %v529, %v530
    %v532 = vrot.slane %v531, 1
    %v533 = vmax.f32 %v531, %v532
    %v534 = vmax.f32 %v482, %v490
    %v535 = vmax.f32 %v484, %v492
    %v536 = vmax.f32 %v486, %v494
    %v537 = vmax.f32 %v488, %v496
    %v538 = vmax.f32 %v534, %v498
    %v539 = vmax.f32 %v535, %v500
    %v540 = vmax.f32 %v536, %v502
    %v541 = vmax.f32 %v537, %v504
    %v542 = vmax.f32 %v538, %v506
    %v543 = vmax.f32 %v539, %v508
    %v544 = vmax.f32 %v540, %v510
    %v545 = vmax.f32 %v541, %v512
    %v546 = vmax.f32 %v542, %v543
    %v547 = vmax.f32 %v544, %v545
    %v548 = vmax.f32 %v546, %v547
    %v549 = vrot.slane %v548, 4
    %v550 = vmax.f32 %v548, %v549
    %v551 = vrot.slane %v550, 2
    %v552 = vmax.f32 %v550, %v551
    %v553 = vrot.slane %v552, 1
    %v554 = vmax.f32 %v552, %v553
    %v555 = vsub.f32 %v465, %v482
    %v556 = vsub.f32 %v466, %v484
    %v557 = vsub.f32 %v467, %v486
    %v558 = vsub.f32 %v468, %v488
    %v559 = vsub.f32 %v469, %v490
    %v560 = vsub.f32 %v470, %v492
    %v561 = vsub.f32 %v471, %v494
    %v562 = vsub.f32 %v472, %v496
    %v563 = vsub.f32 %v473, %v498
    %v564 = vsub.f32 %v474, %v500
    %v565 = vsub.f32 %v475, %v502
    %v566 = vsub.f32 %v476, %v504
    %v567 = vsub.f32 %v477, %v506
    %v568 = vsub.f32 %v478, %v508
    %v569 = vsub.f32 %v479, %v510
    %v570 = vsub.f32 %v480, %v512
    %v571 = vmul.f32 %v555, 1.442695
    %v572 = vpow.pop %v571
    %v573 = vmul.f32 %v556, 1.442695
    %v574 = vpow.pop %v573
    %v575 = vmul.f32 %v557, 1.442695
    %v576 = vpow.pop %v575
    %v577 = vmul.f32 %v558, 1.442695
    %v578 = vpow.pop %v577
    %v579 = vmul.f32 %v559, 1.442695
    %v580 = vpow.pop %v579
    %v581 = vmul.f32 %v560, 1.442695
    %v582 = vpow.pop %v581
    %v583 = vmul.f32 %v561, 1.442695
    %v584 = vpow.pop %v583
    %v585 = vmul.f32 %v562, 1.442695
    %v586 = vpow.pop %v585
    %v587 = vmul.f32 %v563, 1.442695
    %v588 = vpow.pop %v587
    %v589 = vmul.f32 %v564, 1.442695
    %v590 = vpow.pop %v589
    %v591 = vmul.f32 %v565, 1.442695
    %v592 = vpow.pop %v591
    %v593 = vmul.f32 %v566, 1.442695
    %v594 = vpow.pop %v593
    %v595 = vmul.f32 %v567, 1.442695
    %v596 = vpow.pop %v595
    %v597 = vmul.f32 %v568, 1.442695
    %v598 = vpow.pop %v597
    %v599 = vmul.f32 %v569, 1.442695
    %v600 = vpow.pop %v599
    %v601 = vmul.f32 %v570, 1.442695
    %v602 = vpow.pop %v601
    %603 = vadd.xlane.f32.xlu0 %v572
    %v604 = vpop.xlane.xlu0 %603
    %605 = vadd.xlane.f32.xlu0 %v574
    %v606 = vpop.xlane.xlu0 %605
    %607 = vadd.xlane.f32.xlu0 %v576
    %v608 = vpop.xlane.xlu0 %607
    %609 = vadd.xlane.f32.xlu0 %v578
    %v610 = vpop.xlane.xlu0 %609
    %611 = vadd.xlane.f32.xlu0 %v580
    %v612 = vpop.xlane.xlu0 %611
    %613 = vadd.xlane.f32.xlu0 %v582
    %v614 = vpop.xlane.xlu0 %613
    %615 = vadd.xlane.f32.xlu0 %v584
    %v616 = vpop.xlane.xlu0 %615
    %617 = vadd.xlane.f32.xlu0 %v586
    %v618 = vpop.xlane.xlu0 %617
    %619 = vadd.xlane.f32.xlu0 %v588
    %v620 = vpop.xlane.xlu0 %619
    %621 = vadd.xlane.f32.xlu0 %v590
    %v622 = vpop.xlane.xlu0 %621
    %623 = vadd.xlane.f32.xlu0 %v592
    %v624 = vpop.xlane.xlu0 %623
    %625 = vadd.xlane.f32.xlu0 %v594
    %v626 = vpop.xlane.xlu0 %625
    %627 = vadd.xlane.f32.xlu0 %v596
    %v628 = vpop.xlane.xlu0 %627
    %629 = vadd.xlane.f32.xlu0 %v598
    %v630 = vpop.xlane.xlu0 %629
    %631 = vadd.xlane.f32.xlu0 %v600
    %v632 = vpop.xlane.xlu0 %631
    %633 = vadd.xlane.f32.xlu0 %v602
    %v634 = vpop.xlane.xlu0 %633
    %v635 = vsub.f32 %v482, %v554
    %v636 = vsub.f32 %v484, %v554
    %v637 = vsub.f32 %v486, %v554
    %v638 = vsub.f32 %v488, %v554
    %v639 = vsub.f32 %v490, %v554
    %v640 = vsub.f32 %v492, %v554
    %v641 = vsub.f32 %v494, %v554
    %v642 = vsub.f32 %v496, %v554
    %v643 = vsub.f32 %v498, %v554
    %v644 = vsub.f32 %v500, %v554
    %v645 = vsub.f32 %v502, %v554
    %v646 = vsub.f32 %v504, %v554
    %v647 = vsub.f32 %v506, %v554
    %v648 = vsub.f32 %v508, %v554
    %v649 = vsub.f32 %v510, %v554
    %v650 = vsub.f32 %v512, %v554
    %v651 = vmul.f32 %v635, 1.442695
    %v652 = vpow.pop %v651
    %v653 = vmul.f32 %v636, 1.442695
    %v654 = vpow.pop %v653
    %v655 = vmul.f32 %v637, 1.442695
    %v656 = vpow.pop %v655
    %v657 = vmul.f32 %v638, 1.442695
    %v658 = vpow.pop %v657
    %v659 = vmul.f32 %v639, 1.442695
    %v660 = vpow.pop %v659
    %v661 = vmul.f32 %v640, 1.442695
    %v662 = vpow.pop %v661
    %v663 = vmul.f32 %v641, 1.442695
    %v664 = vpow.pop %v663
    %v665 = vmul.f32 %v642, 1.442695
    %v666 = vpow.pop %v665
    %v667 = vmul.f32 %v643, 1.442695
    %v668 = vpow.pop %v667
    %v669 = vmul.f32 %v644, 1.442695
    %v670 = vpow.pop %v669
    %v671 = vmul.f32 %v645, 1.442695
    %v672 = vpow.pop %v671
    %v673 = vmul.f32 %v646, 1.442695
    %v674 = vpow.pop %v673
    %v675 = vmul.f32 %v647, 1.442695
    %v676 = vpow.pop %v675
    %v677 = vmul.f32 %v648, 1.442695
    %v678 = vpow.pop %v677
    %v679 = vmul.f32 %v649, 1.442695
    %v680 = vpow.pop %v679
    %v681 = vmul.f32 %v650, 1.442695
    %v682 = vpow.pop %v681
    %v683 = vmul.f32 %v572, %v652
    %v684 = vmul.f32 %v574, %v654
    %v685 = vmul.f32 %v576, %v656
    %v686 = vmul.f32 %v578, %v658
    %v687 = vmul.f32 %v580, %v660
    %v688 = vmul.f32 %v582, %v662
    %v689 = vmul.f32 %v584, %v664
    %v690 = vmul.f32 %v586, %v666
    %v691 = vmul.f32 %v588, %v668
    %v692 = vmul.f32 %v590, %v670
    %v693 = vmul.f32 %v592, %v672
    %v694 = vmul.f32 %v594, %v674
    %v695 = vmul.f32 %v596, %v676
    %v696 = vmul.f32 %v598, %v678
    %v697 = vmul.f32 %v600, %v680
    %v698 = vmul.f32 %v602, %v682
    %v699 = vadd.f32 %v683, %v684
    %v700 = vadd.f32 %v699, %v685
    %v701 = vadd.f32 %v700, %v686
    %v702 = vadd.f32 %v701, %v687
    %v703 = vadd.f32 %v702, %v688
    %v704 = vadd.f32 %v703, %v689
    %v705 = vadd.f32 %v704, %v690
    %v706 = vadd.f32 %v705, %v691
    %v707 = vadd.f32 %v706, %v692
    %v708 = vadd.f32 %v707, %v693
    %v709 = vadd.f32 %v708, %v694
    %v710 = vadd.f32 %v709, %v695
    %v711 = vadd.f32 %v710, %v696
    %v712 = vadd.f32 %v711, %v697
    %v713 = vadd.f32 %v712, %v698
    %v714 = vrot.slane %v713, 4
    %v715 = vadd.f32 %v713, %v714
    %v716 = vrot.slane %v715, 2
    %v717 = vadd.f32 %v715, %v716
    %v718 = vrot.slane %v717, 1
    %v719 = vadd.f32 %v717, %v718
    %v720 = vld [vmem:[#allocation2] sm:$0xff]
    %v721 = vld [vmem:[#allocation2 + $0x8] sm:$0xff]
    %v722 = vld [vmem:[#allocation2 + $0x10] sm:$0xff]
    %v723 = vld [vmem:[#allocation2 + $0x18] sm:$0xff]
    %v724 = vld [vmem:[#allocation2 + $0x20] sm:$0xff]
    %v725 = vld [vmem:[#allocation2 + $0x28] sm:$0xff]
    %v726 = vld [vmem:[#allocation2 + $0x30] sm:$0xff]
    %v727 = vld [vmem:[#allocation2 + $0x38] sm:$0xff]
    %v728 = vld [vmem:[#allocation2 + $0x40] sm:$0xff]
    %v729 = vld [vmem:[#allocation2 + $0x48] sm:$0xff]
    %v730 = vld [vmem:[#allocation2 + $0x50] sm:$0xff]
    %v731 = vld [vmem:[#allocation2 + $0x58] sm:$0xff]
    %v732 = vld [vmem:[#allocation2 + $0x60] sm:$0xff]
    %v733 = vld [vmem:[#allocation2 + $0x68] sm:$0xff]
    %v734 = vld [vmem:[#allocation2 + $0x70] sm:$0xff]
    %v735 = vld [vmem:[#allocation2 + $0x78] sm:$0xff]
    %v736 = vmax.f32 %v720, %v482
    %v737 = vmax.f32 %v721, %v484
    %v738 = vmax.f32 %v722, %v486
    %v739 = vmax.f32 %v723, %v488
    %v740 = vmax.f32 %v724, %v490
    %v741 = vmax.f32 %v725, %v492
    %v742 = vmax.f32 %v726, %v494
    %v743 = vmax.f32 %v727, %v496
    %v744 = vmax.f32 %v728, %v498
    %v745 = vmax.f32 %v729, %v500
    %v746 = vmax.f32 %v730, %v502
    %v747 = vmax.f32 %v731, %v504
    %v748 = vmax.f32 %v732, %v506
    %v749 = vmax.f32 %v733, %v508
    %v750 = vmax.f32 %v734, %v510
    %v751 = vmax.f32 %v735, %v512
    %v752 = vsub.f32 %v720, %v736
    %v753 = vsub.f32 %v721, %v737
    %v754 = vsub.f32 %v722, %v738
    %v755 = vsub.f32 %v723, %v739
    %v756 = vsub.f32 %v724, %v740
    %v757 = vsub.f32 %v725, %v741
    %v758 = vsub.f32 %v726, %v742
    %v759 = vsub.f32 %v727, %v743
    %v760 = vsub.f32 %v728, %v744
    %v761 = vsub.f32 %v729, %v745
    %v762 = vsub.f32 %v730, %v746
    %v763 = vsub.f32 %v731, %v747
    %v764 = vsub.f32 %v732, %v748
    %v765 = vsub.f32 %v733, %v749
    %v766 = vsub.f32 %v734, %v750
    %v767 = vsub.f32 %v735, %v751
    %v768 = vmul.f32 %v752, 1.442695
    %v769 = vpow.pop %v768
    %v770 = vmul.f32 %v753, 1.442695
    %v771 = vpow.pop %v770
    %v772 = vmul.f32 %v754, 1.442695
    %v773 = vpow.pop %v772
    %v774 = vmul.f32 %v755, 1.442695
    %v775 = vpow.pop %v774
    %v776 = vmul.f32 %v756, 1.442695
    %v777 = vpow.pop %v776
    %v778 = vmul.f32 %v757, 1.442695
    %v779 = vpow.pop %v778
    %v780 = vmul.f32 %v758, 1.442695
    %v781 = vpow.pop %v780
    %v782 = vmul.f32 %v759, 1.442695
    %v783 = vpow.pop %v782
    %v784 = vmul.f32 %v760, 1.442695
    %v785 = vpow.pop %v784
    %v786 = vmul.f32 %v761, 1.442695
    %v787 = vpow.pop %v786
    %v788 = vmul.f32 %v762, 1.442695
    %v789 = vpow.pop %v788
    %v790 = vmul.f32 %v763, 1.442695
    %v791 = vpow.pop %v790
    %v792 = vmul.f32 %v764, 1.442695
    %v793 = vpow.pop %v792
    %v794 = vmul.f32 %v765, 1.442695
    %v795 = vpow.pop %v794
    %v796 = vmul.f32 %v766, 1.442695
    %v797 = vpow.pop %v796
    %v798 = vmul.f32 %v767, 1.442695
    %v799 = vpow.pop %v798
    %v800 = vld [vmem:[#allocation3] sm:$0xff]
    %v801 = vld [vmem:[#allocation3 + $0x8] sm:$0xff]
    %v802 = vld [vmem:[#allocation3 + $0x10] sm:$0xff]
    %v803 = vld [vmem:[#allocation3 + $0x18] sm:$0xff]
    %v804 = vld [vmem:[#allocation3 + $0x20] sm:$0xff]
    %v805 = vld [vmem:[#allocation3 + $0x28] sm:$0xff]
    %v806 = vld [vmem:[#allocation3 + $0x30] sm:$0xff]
    %v807 = vld [vmem:[#allocation3 + $0x38] sm:$0xff]
    %v808 = vld [vmem:[#allocation3 + $0x40] sm:$0xff]
    %v809 = vld [vmem:[#allocation3 + $0x48] sm:$0xff]
    %v810 = vld [vmem:[#allocation3 + $0x50] sm:$0xff]
    %v811 = vld [vmem:[#allocation3 + $0x58] sm:$0xff]
    %v812 = vld [vmem:[#allocation3 + $0x60] sm:$0xff]
    %v813 = vld [vmem:[#allocation3 + $0x68] sm:$0xff]
    %v814 = vld [vmem:[#allocation3 + $0x70] sm:$0xff]
    %v815 = vld [vmem:[#allocation3 + $0x78] sm:$0xff]
    %v816 = vmul.f32 %v769, %v800
    %v817 = vmul.f32 %v771, %v801
    %v818 = vmul.f32 %v773, %v802
    %v819 = vmul.f32 %v775, %v803
    %v820 = vmul.f32 %v777, %v804
    %v821 = vmul.f32 %v779, %v805
    %v822 = vmul.f32 %v781, %v806
    %v823 = vmul.f32 %v783, %v807
    %v824 = vmul.f32 %v785, %v808
    %v825 = vmul.f32 %v787, %v809
    %v826 = vmul.f32 %v789, %v810
    %v827 = vmul.f32 %v791, %v811
    %v828 = vmul.f32 %v793, %v812
    %v829 = vmul.f32 %v795, %v813
    %v830 = vmul.f32 %v797, %v814
    %v831 = vmul.f32 %v799, %v815
    %v832 = vsub.f32 %v482, %v736
    %v833 = vsub.f32 %v484, %v737
    %v834 = vsub.f32 %v486, %v738
    %v835 = vsub.f32 %v488, %v739
    %v836 = vsub.f32 %v490, %v740
    %v837 = vsub.f32 %v492, %v741
    %v838 = vsub.f32 %v494, %v742
    %v839 = vsub.f32 %v496, %v743
    %v840 = vsub.f32 %v498, %v744
    %v841 = vsub.f32 %v500, %v745
    %v842 = vsub.f32 %v502, %v746
    %v843 = vsub.f32 %v504, %v747
    %v844 = vsub.f32 %v506, %v748
    %v845 = vsub.f32 %v508, %v749
    %v846 = vsub.f32 %v510, %v750
    %v847 = vsub.f32 %v512, %v751
    %v848 = vmul.f32 %v832, 1.442695
    %v849 = vpow.pop %v848
    %v850 = vmul.f32 %v833, 1.442695
    %v851 = vpow.pop %v850
    %v852 = vmul.f32 %v834, 1.442695
    %v853 = vpow.pop %v852
    %v854 = vmul.f32 %v835, 1.442695
    %v855 = vpow.pop %v854
    %v856 = vmul.f32 %v836, 1.442695
    %v857 = vpow.pop %v856
    %v858 = vmul.f32 %v837, 1.442695
    %v859 = vpow.pop %v858
    %v860 = vmul.f32 %v838, 1.442695
    %v861 = vpow.pop %v860
    %v862 = vmul.f32 %v839, 1.442695
    %v863 = vpow.pop %v862
    %v864 = vmul.f32 %v840, 1.442695
    %v865 = vpow.pop %v864
    %v866 = vmul.f32 %v841, 1.442695
    %v867 = vpow.pop %v866
    %v868 = vmul.f32 %v842, 1.442695
    %v869 = vpow.pop %v868
    %v870 = vmul.f32 %v843, 1.442695
    %v871 = vpow.pop %v870
    %v872 = vmul.f32 %v844, 1.442695
    %v873 = vpow.pop %v872
    %v874 = vmul.f32 %v845, 1.442695
    %v875 = vpow.pop %v874
    %v876 = vmul.f32 %v846, 1.442695
    %v877 = vpow.pop %v876
    %v878 = vmul.f32 %v847, 1.442695
    %v879 = vpow.pop %v878
    %v880 = vmul.f32 %v604, %v849
    %v881 = vmul.f32 %v606, %v851
    %v882 = vmul.f32 %v608, %v853
    %v883 = vmul.f32 %v610, %v855
    %v884 = vmul.f32 %v612, %v857
    %v885 = vmul.f32 %v614, %v859
    %v886 = vmul.f32 %v616, %v861
    %v887 = vmul.f32 %v618, %v863
    %v888 = vmul.f32 %v620, %v865
    %v889 = vmul.f32 %v622, %v867
    %v890 = vmul.f32 %v624, %v869
    %v891 = vmul.f32 %v626, %v871
    %v892 = vmul.f32 %v628, %v873
    %v893 = vmul.f32 %v630, %v875
    %v894 = vmul.f32 %v632, %v877
    %v895 = vmul.f32 %v634, %v879
    %v896 = vadd.f32 %v816, %v880
    %v897 = vadd.f32 %v817, %v881
    %v898 = vadd.f32 %v818, %v882
    %v899 = vadd.f32 %v819, %v883
    %v900 = vadd.f32 %v820, %v884
    %v901 = vadd.f32 %v821, %v885
    %v902 = vadd.f32 %v822, %v886
    %v903 = vadd.f32 %v823, %v887
    %v904 = vadd.f32 %v824, %v888
    %v905 = vadd.f32 %v825, %v889
    %v906 = vadd.f32 %v826, %v890
    %v907 = vadd.f32 %v827, %v891
    %v908 = vadd.f32 %v828, %v892
    %v909 = vadd.f32 %v829, %v893
    %v910 = vadd.f32 %v830, %v894
    %v911 = vadd.f32 %v831, %v895
    %vm912 = vcmask 7168
    %913 = vst.msk [vmem:[#allocation3] sm:$0xff] %vm912, %v896
    %914 = vst.msk [vmem:[#allocation3 + $0x8] sm:$0xff] %vm912, %v897
    %915 = vst.msk [vmem:[#allocation3 + $0x10] sm:$0xff] %vm912, %v898
    %916 = vst.msk [vmem:[#allocation3 + $0x18] sm:$0xff] %vm912, %v899
    %917 = vst.msk [vmem:[#allocation3 + $0x20] sm:$0xff] %vm912, %v900
    %918 = vst.msk [vmem:[#allocation3 + $0x28] sm:$0xff] %vm912, %v901
    %919 = vst.msk [vmem:[#allocation3 + $0x30] sm:$0xff] %vm912, %v902
    %920 = vst.msk [vmem:[#allocation3 + $0x38] sm:$0xff] %vm912, %v903
    %921 = vst.msk [vmem:[#allocation3 + $0x40] sm:$0xff] %vm912, %v904
    %922 = vst.msk [vmem:[#allocation3 + $0x48] sm:$0xff] %vm912, %v905
    %923 = vst.msk [vmem:[#allocation3 + $0x50] sm:$0xff] %vm912, %v906
    %924 = vst.msk [vmem:[#allocation3 + $0x58] sm:$0xff] %vm912, %v907
    %925 = vst.msk [vmem:[#allocation3 + $0x60] sm:$0xff] %vm912, %v908
    %926 = vst.msk [vmem:[#allocation3 + $0x68] sm:$0xff] %vm912, %v909
    %927 = vst.msk [vmem:[#allocation3 + $0x70] sm:$0xff] %vm912, %v910
    %928 = vst.msk [vmem:[#allocation3 + $0x78] sm:$0xff] %vm912, %v911
    %929 = vst.msk [vmem:[#allocation2] sm:$0xff] %vm912, %v736
    %930 = vst.msk [vmem:[#allocation2 + $0x8] sm:$0xff] %vm912, %v737
    %931 = vst.msk [vmem:[#allocation2 + $0x10] sm:$0xff] %vm912, %v738
    %932 = vst.msk [vmem:[#allocation2 + $0x18] sm:$0xff] %vm912, %v739
    %933 = vst.msk [vmem:[#allocation2 + $0x20] sm:$0xff] %vm912, %v740
    %934 = vst.msk [vmem:[#allocation2 + $0x28] sm:$0xff] %vm912, %v741
    %935 = vst.msk [vmem:[#allocation2 + $0x30] sm:$0xff] %vm912, %v742
    %936 = vst.msk [vmem:[#allocation2 + $0x38] sm:$0xff] %vm912, %v743
    %937 = vst.msk [vmem:[#allocation2 + $0x40] sm:$0xff] %vm912, %v744
    %938 = vst.msk [vmem:[#allocation2 + $0x48] sm:$0xff] %vm912, %v745
    %939 = vst.msk [vmem:[#allocation2 + $0x50] sm:$0xff] %vm912, %v746
    %940 = vst.msk [vmem:[#allocation2 + $0x58] sm:$0xff] %vm912, %v747
    %941 = vst.msk [vmem:[#allocation2 + $0x60] sm:$0xff] %vm912, %v748
    %942 = vst.msk [vmem:[#allocation2 + $0x68] sm:$0xff] %vm912, %v749
    %943 = vst.msk [vmem:[#allocation2 + $0x70] sm:$0xff] %vm912, %v750
    %944 = vst.msk [vmem:[#allocation2 + $0x78] sm:$0xff] %vm912, %v751
    %v945 = vld [vmem:[#allocation4] sm:$0x1]
    %v946 = vld [vmem:[#allocation5] sm:$0x1]
    %v947 = vmax.f32 %v945, %v533
    %vm948 = vcmp.gt.f32.partialorder %v719, 0.0
    %v949 = vsel %vm948, %v719, 1.0
    %v950 = vlog2.pop %v949
    %v951 = vmul.f32 %v950, 0.6931472
    %v952 = vsub.f32 %v554, %v947
    %v953 = vadd.f32 %v951, %v952
    %v954 = vmul.f32 %v953, 1.442695
    %v955 = vpow.pop %v954
    %v956 = vsel %vm948, %v955, 0.0
    %v957 = vsub.f32 %v533, %v947
    %v958 = vmul.f32 %v957, 1.442695
    %v959 = vpow.pop %v958
    %v960 = vmax.f32 %v956, %v959
    %v961 = vsub.f32 %v945, %v947
    %v962 = vmul.f32 %v961, 1.442695
    %v963 = vpow.pop %v962
    %v964 = vmul.f32 %v963, %v946
    %v965 = vadd.f32 %v964, %v960
    %966 = vst [vmem:[#allocation5] sm:$0x1] %v965
    %967 = vst [vmem:[#allocation4] sm:$0x1] %v947
    %s968 = sadd.s32 0, 1
    %s969 = smul.u32 %s968, 128
    %p970 = scmp.lt.s32.totalorder %s359, %s969
    %s971 = sadd.s32 0, 1
    %s972 = smul.u32 %s971, 128
    %p973 = scmp.lt.s32.totalorder %s81, %s972
    %p974 = pnand %p970, %p973
    %p975 = pneg %p974
    // Predicated region
    $region26: #{clip_loss.1} parent=1 // pred_check
      _
    $region27: #{clip_loss.1} parent=1 // pred_check_branch
      %977 = sbr.rel (%p974) target = $region29
    $region28: #{clip_loss.1} parent=1 // pred_region
      %vm978 = vcmp.eq.s32.totalorder %v378, %v413
      %vm979 = vcmp.eq.s32.totalorder %v379, %v413
      %vm980 = vcmp.eq.s32.totalorder %v380, %v413
      %vm981 = vcmp.eq.s32.totalorder %v381, %v413
      %vm982 = vcmp.eq.s32.totalorder %v382, %v413
      %vm983 = vcmp.eq.s32.totalorder %v383, %v413
      %vm984 = vcmp.eq.s32.totalorder %v384, %v413
      %vm985 = vcmp.eq.s32.totalorder %v385, %v413
      %vm986 = vcmp.eq.s32.totalorder %v386, %v413
      %vm987 = vcmp.eq.s32.totalorder %v387, %v413
      %vm988 = vcmp.eq.s32.totalorder %v388, %v413
      %vm989 = vcmp.eq.s32.totalorder %v389, %v413
      %vm990 = vcmp.eq.s32.totalorder %v390, %v413
      %vm991 = vcmp.eq.s32.totalorder %v391, %v413
      %vm992 = vcmp.eq.s32.totalorder %v392, %v413
      %vm993 = vcmp.eq.s32.totalorder %v393, %v413
      %v994 = vsel %vm978, %v263, 0.0
      %v995 = vsel %vm979, %v268, 0.0
      %v996 = vsel %vm980, %v273, 0.0
      %v997 = vsel %vm981, %v278, 0.0
      %v998 = vsel %vm982, %v283, 0.0
      %v999 = vsel %vm983, %v288, 0.0
      %v1000 = vsel %vm984, %v293, 0.0
      %v1001 = vsel %vm985, %v298, 0.0
      %v1002 = vsel %vm986, %v303, 0.0
      %v1003 = vsel %vm987, %v308, 0.0
      %v1004 = vsel %vm988, %v313, 0.0
      %v1005 = vsel %vm989, %v318, 0.0
      %v1006 = vsel %vm990, %v323, 0.0
      %v1007 = vsel %vm991, %v328, 0.0
      %v1008 = vsel %vm992, %v333, 0.0
      %v1009 = vsel %vm993, %v338, 0.0
      %v1010 = vadd.f32 %v994, %v995
      %v1011 = vadd.f32 %v1010, %v996
      %v1012 = vadd.f32 %v1011, %v997
      %v1013 = vadd.f32 %v1012, %v998
      %v1014 = vadd.f32 %v1013, %v999
      %v1015 = vadd.f32 %v1014, %v1000
      %v1016 = vadd.f32 %v1015, %v1001
      %v1017 = vadd.f32 %v1016, %v1002
      %v1018 = vadd.f32 %v1017, %v1003
      %v1019 = vadd.f32 %v1018, %v1004
      %v1020 = vadd.f32 %v1019, %v1005
      %v1021 = vadd.f32 %v1020, %v1006
      %v1022 = vadd.f32 %v1021, %v1007
      %v1023 = vadd.f32 %v1022, %v1008
      %v1024 = vadd.f32 %v1023, %v1009
      %1025 = vadd.xlane.f32.xlu0 %v1024
      %v1026 = vpop.xlane.xlu0 %1025
      %v1027 = vrot.slane %v1026, 4
      %v1028 = vadd.f32 %v1026, %v1027
      %v1029 = vrot.slane %v1028, 2
      %v1030 = vadd.f32 %v1028, %v1029
      %v1031 = vrot.slane %v1030, 1
      %v1032 = vadd.f32 %v1030, %v1031
      %s1033 = vtos %v1032
      %s1034 = sld [smem:[#allocation6]]
      %s1035 = smul.f32 %s341, 2.0
      %s1036 = smul.f32 %s1035, %s1033
      %s1037 = ssub.f32 %s1034, %s1036
      %s1038 = scalar_lea.smem [#allocation6], 0
      %1039 = sst [smem:[%s1038]] %s1037
    $region29: #{clip_loss.1} parent=1 // pred_fallthru
      _
    // Predicated region
    $region30: #{clip_loss.1} parent=1 // pred_check
      %p1040 = pneg %p17
    $region31: #{clip_loss.1} parent=1 // pred_check_branch
      %1042 = sbr.rel (%p1040) target = $region33
    $region32: #{clip_loss.1} parent=1 // pred_region
      %v1043 = vld [vmem:[#allocation2] sm:$0xff]
      %v1044 = vld [vmem:[#allocation2 + $0x8] sm:$0xff]
      %v1045 = vld [vmem:[#allocation2 + $0x10] sm:$0xff]
      %v1046 = vld [vmem:[#allocation2 + $0x18] sm:$0xff]
      %v1047 = vld [vmem:[#allocation2 + $0x20] sm:$0xff]
      %v1048 = vld [vmem:[#allocation2 + $0x28] sm:$0xff]
      %v1049 = vld [vmem:[#allocation2 + $0x30] sm:$0xff]
      %v1050 = vld [vmem:[#allocation2 + $0x38] sm:$0xff]
      %v1051 = vld [vmem:[#allocation2 + $0x40] sm:$0xff]
      %v1052 = vld [vmem:[#allocation2 + $0x48] sm:$0xff]
      %v1053 = vld [vmem:[#allocation2 + $0x50] sm:$0xff]
      %v1054 = vld [vmem:[#allocation2 + $0x58] sm:$0xff]
      %v1055 = vld [vmem:[#allocation2 + $0x60] sm:$0xff]
      %v1056 = vld [vmem:[#allocation2 + $0x68] sm:$0xff]
      %v1057 = vld [vmem:[#allocation2 + $0x70] sm:$0xff]
      %v1058 = vld [vmem:[#allocation2 + $0x78] sm:$0xff]
      %v1059 = vld [vmem:[#allocation3] sm:$0xff]
      %v1060 = vld [vmem:[#allocation3 + $0x8] sm:$0xff]
      %v1061 = vld [vmem:[#allocation3 + $0x10] sm:$0xff]
      %v1062 = vld [vmem:[#allocation3 + $0x18] sm:$0xff]
      %v1063 = vld [vmem:[#allocation3 + $0x20] sm:$0xff]
      %v1064 = vld [vmem:[#allocation3 + $0x28] sm:$0xff]
      %v1065 = vld [vmem:[#allocation3 + $0x30] sm:$0xff]
      %v1066 = vld [vmem:[#allocation3 + $0x38] sm:$0xff]
      %v1067 = vld [vmem:[#allocation3 + $0x40] sm:$0xff]
      %v1068 = vld [vmem:[#allocation3 + $0x48] sm:$0xff]
      %v1069 = vld [vmem:[#allocation3 + $0x50] sm:$0xff]
      %v1070 = vld [vmem:[#allocation3 + $0x58] sm:$0xff]
      %v1071 = vld [vmem:[#allocation3 + $0x60] sm:$0xff]
      %v1072 = vld [vmem:[#allocation3 + $0x68] sm:$0xff]
      %v1073 = vld [vmem:[#allocation3 + $0x70] sm:$0xff]
      %v1074 = vld [vmem:[#allocation3 + $0x78] sm:$0xff]
      %v1075 = vlog2.pop %v1059
      %v1076 = vmul.f32 %v1075, 0.6931472
      %v1077 = vlog2.pop %v1060
      %v1078 = vmul.f32 %v1077, 0.6931472
      %v1079 = vlog2.pop %v1061
      %v1080 = vmul.f32 %v1079, 0.6931472
      %v1081 = vlog2.pop %v1062
      %v1082 = vmul.f32 %v1081, 0.6931472
      %v1083 = vlog2.pop %v1063
      %v1084 = vmul.f32 %v1083, 0.6931472
      %v1085 = vlog2.pop %v1064
      %v1086 = vmul.f32 %v1085, 0.6931472
      %v1087 = vlog2.pop %v1065
      %v1088 = vmul.f32 %v1087, 0.6931472
      %v1089 = vlog2.pop %v1066
      %v1090 = vmul.f32 %v1089, 0.6931472
      %v1091 = vlog2.pop %v1067
      %v1092 = vmul.f32 %v1091, 0.6931472
      %v1093 = vlog2.pop %v1068
      %v1094 = vmul.f32 %v1093, 0.6931472
      %v1095 = vlog2.pop %v1069
      %v1096 = vmul.f32 %v1095, 0.6931472
      %v1097 = vlog2.pop %v1070
      %v1098 = vmul.f32 %v1097, 0.6931472
      %v1099 = vlog2.pop %v1071
      %v1100 = vmul.f32 %v1099, 0.6931472
      %v1101 = vlog2.pop %v1072
      %v1102 = vmul.f32 %v1101, 0.6931472
      %v1103 = vlog2.pop %v1073
      %v1104 = vmul.f32 %v1103, 0.6931472
      %v1105 = vlog2.pop %v1074
      %v1106 = vmul.f32 %v1105, 0.6931472
      %v1107 = vadd.f32 %v1043, %v1076
      %v1108 = vadd.f32 %v1044, %v1078
      %v1109 = vadd.f32 %v1045, %v1080
      %v1110 = vadd.f32 %v1046, %v1082
      %v1111 = vadd.f32 %v1047, %v1084
      %v1112 = vadd.f32 %v1048, %v1086
      %v1113 = vadd.f32 %v1049, %v1088
      %v1114 = vadd.f32 %v1050, %v1090
      %v1115 = vadd.f32 %v1051, %v1092
      %v1116 = vadd.f32 %v1052, %v1094
      %v1117 = vadd.f32 %v1053, %v1096
      %v1118 = vadd.f32 %v1054, %v1098
      %v1119 = vadd.f32 %v1055, %v1100
      %v1120 = vadd.f32 %v1056, %v1102
      %v1121 = vadd.f32 %v1057, %v1104
      %v1122 = vadd.f32 %v1058, %v1106
      %v1123 = vsel %vm394, %v1107, 0.0
      %v1124 = vsel %vm395, %v1108, 0.0
      %v1125 = vsel %vm396, %v1109, 0.0
      %v1126 = vsel %vm397, %v1110, 0.0
      %v1127 = vsel %vm398, %v1111, 0.0
      %v1128 = vsel %vm399, %v1112, 0.0
      %v1129 = vsel %vm400, %v1113, 0.0
      %v1130 = vsel %vm401, %v1114, 0.0
      %v1131 = vsel %vm402, %v1115, 0.0
      %v1132 = vsel %vm403, %v1116, 0.0
      %v1133 = vsel %vm404, %v1117, 0.0
      %v1134 = vsel %vm405, %v1118, 0.0
      %v1135 = vsel %vm406, %v1119, 0.0
      %v1136 = vsel %vm407, %v1120, 0.0
      %v1137 = vsel %vm408, %v1121, 0.0
      %v1138 = vsel %vm409, %v1122, 0.0
      %s1139 = sld [smem:[#allocation6]]
      %v1140 = vsel %vm912, %v1123, 0.0
      %v1141 = vsel %vm912, %v1124, 0.0
      %v1142 = vadd.f32 %v1140, %v1141
      %v1143 = vsel %vm912, %v1125, 0.0
      %v1144 = vadd.f32 %v1142, %v1143
      %v1145 = vsel %vm912, %v1126, 0.0
      %v1146 = vadd.f32 %v1144, %v1145
      %v1147 = vsel %vm912, %v1127, 0.0
      %v1148 = vadd.f32 %v1146, %v1147
      %v1149 = vsel %vm912, %v1128, 0.0
      %v1150 = vadd.f32 %v1148, %v1149
      %v1151 = vsel %vm912, %v1129, 0.0
      %v1152 = vadd.f32 %v1150, %v1151
      %v1153 = vsel %vm912, %v1130, 0.0
      %v1154 = vadd.f32 %v1152, %v1153
      %v1155 = vsel %vm912, %v1131, 0.0
      %v1156 = vadd.f32 %v1154, %v1155
      %v1157 = vsel %vm912, %v1132, 0.0
      %v1158 = vadd.f32 %v1156, %v1157
      %v1159 = vsel %vm912, %v1133, 0.0
      %v1160 = vadd.f32 %v1158, %v1159
      %v1161 = vsel %vm912, %v1134, 0.0
      %v1162 = vadd.f32 %v1160, %v1161
      %v1163 = vsel %vm912, %v1135, 0.0
      %v1164 = vadd.f32 %v1162, %v1163
      %v1165 = vsel %vm912, %v1136, 0.0
      %v1166 = vadd.f32 %v1164, %v1165
      %v1167 = vsel %vm912, %v1137, 0.0
      %v1168 = vadd.f32 %v1166, %v1167
      %v1169 = vsel %vm912, %v1138, 0.0
      %v1170 = vadd.f32 %v1168, %v1169
      %1171 = vadd.xlane.f32.xlu0 %v1170
      %v1172 = vpop.xlane.xlu0 %1171
      %v1173 = vrot.slane %v1172, 4
      %v1174 = vadd.f32 %v1172, %v1173
      %v1175 = vrot.slane %v1174, 2
      %v1176 = vadd.f32 %v1174, %v1175
      %v1177 = vrot.slane %v1176, 1
      %v1178 = vadd.f32 %v1176, %v1177
      %s1179 = vtos %v1178
      %s1180 = sadd.f32 %s1139, %s1179
      %s1181 = scalar_lea.smem [#allocation6], 0
      %1182 = sst [smem:[%s1181]] %s1180
    $region33: #{clip_loss.1} parent=1 // pred_fallthru
      _
    // Predicated region
    $region34: #{clip_loss.1} parent=1 // pred_check
      %p1183 = pneg %p16
    $region35: #{clip_loss.1} parent=1 // pred_check_branch
      %1185 = sbr.rel (%p1183) target = $region37
    $region36: #{clip_loss.1} parent=1 // pred_region
      %v1186 = vld [vmem:[#allocation4] sm:$0x1]
      %v1187 = vld [vmem:[#allocation5] sm:$0x1]
      %v1188 = vlog2.pop %v1187
      %v1189 = vmul.f32 %v1188, 0.6931472
      %v1190 = vadd.f32 %v1186, %v1189
      %v1191 = vsel %vm414, %v1190, 0.0
      %s1192 = sld [smem:[#allocation6]]
      %vm1193 = vcmask 1040384
      %v1194 = vsel %vm1193, %v1191, 0.0
      %1195 = vadd.xlane.f32.xlu0 %v1194
      %v1196 = vpop.xlane.xlu0 %1195
      %v1197 = vrot.slane %v1196, 4
      %v1198 = vadd.f32 %v1196, %v1197
      %v1199 = vrot.slane %v1198, 2
      %v1200 = vadd.f32 %v1198, %v1199
      %v1201 = vrot.slane %v1200, 1
      %v1202 = vadd.f32 %v1200, %v1201
      %s1203 = vtos %v1202
      %s1204 = sadd.f32 %s1192, %s1203
      %s1205 = scalar_lea.smem [#allocation6], 0
      %1206 = sst [smem:[%s1205]] %s1204
    $region37: #{clip_loss.1} parent=1 // pred_fallthru
      _
    // Predicated region
    $region38: #{clip_loss.1} parent=1 // pred_check
      _
    $region39: #{clip_loss.1} parent=1 // pred_check_branch
      %1208 = sbr.rel (%p18) target = $region41
    $region40: #{clip_loss.1} parent=1 // pred_region
      %s1209 = sld [smem:[#allocation6]]
      %v1210 = vrcp.pop 16.0
      %s1211 = vtos %v1210
      %s1212 = smul.f32 %s1209, %s1211
      %s1213 = scalar_lea.smem [#allocation8], 0
      %1214 = sst [smem:[%s1213]] %s1212
    $region41: #{clip_loss.1} parent=1 // pred_fallthru
      _
    // Predicated region
    $region42: #{clip_loss.1} parent=1 // pred_check
      _
    $region43: #{clip_loss.1} parent=1 // pred_check_branch
      %1216 = sbr.rel (0) target = $region45
    $region44: #{clip_loss.1} parent=1 // pred_region
      %s1218 = ssub.s32 16, 16
      %1219 = vsyncadd [#allocation9], %s1218
      %1222 = dma.smem_to_hbm [#allocation8], 16, %s3, [#allocation9]
    $region45: #{clip_loss.1} parent=1 // pred_fallthru
      _
    // Predicated region
    $region46: #{clip_loss.1} parent=1 // pred_check
      _
    $region47: #{clip_loss.1} parent=1 // pred_check_branch
      %1224 = sbr.rel (0) target = $region49
    $region48: #{clip_loss.1} parent=1 // pred_region
      %1225 = dma.done [#allocation9], 16
    $region49: #{clip_loss.1} parent=1 // pred_fallthru
      _
    %1226 = sfence
    %1227 = vsyncpa [#allocation9], 1

</llo_original>
